<compile_context>
chip_gen: v6e
topology: v6e:2x2x1
jax: 0.10.0
libtpu: 0.0.40
codegen_flags: <defaults>
</compile_context>

<pallas_src>
import functools
import math

import jax
import jax.numpy as jnp
import numpy as np
from jax.experimental import pallas as pl
from jax.experimental.pallas import tpu as pltpu

LN_EPS = 1e-5  # PyTorch nn.LayerNorm default


def _layernorm(x, g, b):
    mu = jnp.mean(x, axis=-1, keepdims=True)
    var = jnp.mean((x - mu) ** 2, axis=-1, keepdims=True)  # biased, like PyTorch
    return (x - mu) * jax.lax.rsqrt(var + LN_EPS) * g + b


# ------------------------------- fused layer kernel ---------------------------


def _transformer_layer_kernel(
    x_ref, ln1g_ref, ln1b_ref, wqkv_ref, wout_ref,
    ln2g_ref, ln2b_ref, w1p_ref, b1p_ref, w2p_ref, b2_ref,
    o_ref, xn2_scr, acc_scr,
    *, heads, dim_head, tq, tkv, ht, approx_gelu,
):
    h_idx = pl.program_id(1)
    n_h = pl.num_programs(1)
    f32, bf16 = jnp.float32, jnp.bfloat16

    # ---- hidden-tile step 0: attention + residual + LN2 + FF-acc init --------
    @pl.when(h_idx == 0)
    def _attention_and_init():
        x = x_ref[0].astype(f32)                              # (N, D)
        N, D = x.shape
        inner = heads * dim_head
        scale = dim_head ** -0.5

        xn = _layernorm(x, ln1g_ref[...], ln1b_ref[...])      # f32 stats
        qkv = jnp.dot(xn.astype(bf16), wqkv_ref[...],
                      preferred_element_type=f32)             # (N, 3*inner) f32

        # (N, inner) -> (heads, N, dim_head). TODO(synk): weight repack to skip
        # this lane-slice + stack relayout (see header).
        def head_major(base, q_scale=None):
            cols = [qkv[:, base + hh * dim_head: base + (hh + 1) * dim_head]
                    for hh in range(heads)]
            t = jnp.stack(cols, axis=0)                       # (H, N, d) f32
            if q_scale is not None:
                t = t * q_scale
            return t.astype(bf16)

        q = head_major(0, q_scale=scale)                      # (H, N, d) bf16
        k = head_major(inner)
        v = head_major(2 * inner)

        # Flash-style tiled attention with online softmax: live score block is
        # (H, tq, tkv) instead of (H, N, N).
        n_q = N // tq
        n_kv = N // tkv
        wout = wout_ref[...]                                  # (inner, D) bf16
        proj_rows = []
        for qi in range(n_q):
            q_t = q[:, qi * tq:(qi + 1) * tq, :]              # (H, tq, d)
            m_i = jnp.full((heads, tq, 1), -jnp.inf, f32)
            l_i = jnp.zeros((heads, tq, 1), f32)
            acc = jnp.zeros((heads, tq, dim_head), f32)
            for ki in range(n_kv):
                k_t = k[:, ki * tkv:(ki + 1) * tkv, :]        # (H, tkv, d)
                v_t = v[:, ki * tkv:(ki + 1) * tkv, :]
                s = jnp.einsum("hqd,hkd->hqk", q_t, k_t,
                               preferred_element_type=f32)    # (H, tq, tkv) f32
                m_new = jnp.maximum(m_i, jnp.max(s, axis=-1, keepdims=True))
                alpha = jnp.exp(m_i - m_new)
                p = jnp.exp(s - m_new)
                l_i = alpha * l_i + jnp.sum(p, axis=-1, keepdims=True)
                acc = alpha * acc + jnp.einsum(
                    "hqk,hkd->hqd", p.astype(bf16), v_t,
                    preferred_element_type=f32)
                m_i = m_new
            r = pl.reciprocal(l_i, approx=True)               # EUP slot
            r = r * (2.0 - l_i * r)                           # Newton -> ~f32 accuracy
            o_t = acc * r                                     # (H, tq, d) f32

            # Single output-projection matmul with K = inner (full MXU depth):
            # concat heads along lanes, then one (tq, inner) @ (inner, D).
            o_rows = jnp.concatenate([o_t[hh] for hh in range(heads)], axis=-1)
            proj_rows.append(jnp.dot(o_rows.astype(bf16), wout,
                                     preferred_element_type=f32))
        proj = proj_rows[0] if n_q == 1 else jnp.concatenate(proj_rows, axis=0)

        y = proj + x                                          # residual 1
        xn2_scr[...] = _layernorm(y, ln2g_ref[...], ln2b_ref[...]).astype(bf16)
        acc_scr[...] = y + b2_ref[...]                        # residual 2 + FF out-bias

    # ---- every step: one fused GEGLU hidden tile ------------------------------
    xn2 = xn2_scr[...]                                        # (N, D) bf16
    # Single matmul for both GEGLU halves: w1p tile = [wa_tile | wg_tile].
    ag = jnp.dot(xn2, w1p_ref[0], preferred_element_type=f32) + b1p_ref[0]
    a = ag[:, :ht]
    g = ag[:, ht:]
    # tanh-approx gelu routes to the EUP (idle while MXU is busy); ~3e-3 max
    # deviation from PyTorch's exact erf gelu.
    act = a * jax.nn.gelu(g, approximate=approx_gelu)
    acc_scr[...] += jnp.dot(act.astype(bf16), w2p_ref[0],
                            preferred_element_type=f32)

    @pl.when(h_idx == n_h - 1)
    def _finalize():
        o_ref[0] = acc_scr[...].astype(o_ref.dtype)


# ------------------------------ wrapper ---------------------------------------


def sin_cos_pos_emb(positions, dim):
    # plain-JAX glue, mirrors Transformer.generate_sin_cos_pos_emb
    pos = positions[..., None].astype(jnp.float32)                      # (B, N, 1)
    div_term = jnp.exp(jnp.arange(0, dim, 2, dtype=jnp.float32)
                       * -(math.log(10000.0) / dim))                    # (dim/2,)
    ang = pos * div_term                                                # (B, N, dim/2)
    pe = jnp.zeros(positions.shape + (dim,), jnp.float32)
    pe = pe.at[..., 0::2].set(jnp.sin(ang))
    pe = pe.at[..., 1::2].set(jnp.cos(ang))
    return pe


def _vmem_capacity_bytes():
    """Per-core VMEM capacity; conservative fallback if the query fails."""
    try:
        return int(pltpu.get_tpu_info().vmem_capacity_bytes)
    except Exception:
        return 64 * 1024 * 1024


def _pick_hidden_tile(hidden, target):
    """Largest multiple-of-128 tile <= target that divides hidden (else hidden)."""
    if hidden <= target:
        return hidden
    for t in range(target - target % 128, 0, -128):
        if hidden % t == 0:
            return t
    return hidden


def _largest_divisor_leq(n, target):
    for t in range(min(n, target), 0, -1):
        if n % t == 0:
            return t
    return n


def _pack_ff(lp, ht):
    """Pack GEGLU halves per hidden tile: w1p[(h)] = [wa_tile | wg_tile]."""
    D, hidden = lp["wa"].shape
    n_h = hidden // ht
    wa3 = lp["wa"].reshape(D, n_h, ht).transpose(1, 0, 2)
    wg3 = lp["wg"].reshape(D, n_h, ht).transpose(1, 0, 2)
    w1p = jnp.concatenate([wa3, wg3], axis=-1)               # (n_h, D, 2*ht) bf16
    ba3 = lp["ba"].reshape(1, n_h, ht).transpose(1, 0, 2)
    bg3 = lp["bg"].reshape(1, n_h, ht).transpose(1, 0, 2)
    b1p = jnp.concatenate([ba3, bg3], axis=-1)               # (n_h, 1, 2*ht) f32
    w2p = lp["w2"].reshape(n_h, ht, D)                       # (n_h, ht, D) bf16
    return w1p, b1p, w2p


def transformer_forward(x, params, heads, dim_head, positions=None, *,
                        hidden_tile=None, vmem_limit_bytes=None,
                        q_tile=256, kv_tile=512, approx_gelu=True):
    B, N, D = x.shape
    if positions is not None:
        x = x + sin_cos_pos_emb(positions, D).astype(x.dtype)
    # Inter-layer activations carried in bf16 (HBM traffic halved); all in-kernel
    # math stays f32.
    x = x.astype(jnp.bfloat16)

    # ---- generation-aware VMEM / tile sizing ----------------------------------
    cap = _vmem_capacity_bytes()
    budget = int(0.75 * cap)                                  # leave Mosaic headroom
    if vmem_limit_bytes is not None:
        budget = min(budget, int(vmem_limit_bytes))

    lp0 = params[0]
    hidden = lp0["wa"].shape[1]                               # = 4 * D
    if hidden_tile is None:
        hidden_tile = 2048 if budget >= 80 * 1024 * 1024 else 1024
    ff_bytes = 6 * D * hidden                                 # packed FF weights, bf16
    if 2 * ff_bytes <= budget // 4:
        ht = hidden        # whole FF weights resident: fetched once per call,
                           # not re-streamed for every batch element.
    else:
        ht = _pick_hidden_tile(hidden, hidden_tile)
    n_h = hidden // ht

    # attention tiles (static, in-kernel slicing)
    tq = _largest_divisor_leq(N, q_tile)
    tkv = _largest_divisor_leq(N, kv_tile)

    grid = (B, n_h)
    x_spec = pl.BlockSpec((1, N, D), lambda b, h: (b, 0, 0))

    def rep_spec(arr):                          # whole array, resident across grid
        zeros = (0,) * arr.ndim
        return pl.BlockSpec(arr.shape, lambda b, h: zeros)

    in_specs = [
        x_spec,
        rep_spec(lp0["ln1_g"]), rep_spec(lp0["ln1_b"]),
        rep_spec(lp0["wqkv"]), rep_spec(lp0["wout"]),
        rep_spec(lp0["ln2_g"]), rep_spec(lp0["ln2_b"]),
        pl.BlockSpec((1, D, 2 * ht), lambda b, h: (h, 0, 0)),     # w1p tile
        pl.BlockSpec((1, 1, 2 * ht), lambda b, h: (h, 0, 0)),     # b1p tile
        pl.BlockSpec((1, ht, D), lambda b, h: (h, 0, 0)),         # w2  tile
        rep_spec(lp0["b2"]),
    ]

    kernel = functools.partial(
        _transformer_layer_kernel,
        heads=heads, dim_head=dim_head, tq=tq, tkv=tkv, ht=ht,
        approx_gelu=approx_gelu)

    layer_call = pl.pallas_call(
        kernel,
        out_shape=jax.ShapeDtypeStruct((B, N, D), x.dtype),
        grid=grid,
        in_specs=in_specs,
        out_specs=x_spec,
        scratch_shapes=[pltpu.VMEM((N, D), jnp.bfloat16),     # LN2 activations
                        pltpu.VMEM((N, D), jnp.float32)],     # FF accumulator
        compiler_params=pltpu.CompilerParams(
            dimension_semantics=("parallel", "arbitrary"),
            vmem_limit_bytes=budget),
    )

    for lp in params:
        w1p, b1p, w2p = _pack_ff(lp, ht)
        x = layer_call(x, lp["ln1_g"], lp["ln1_b"], lp["wqkv"], lp["wout"],
                       lp["ln2_g"], lp["ln2_b"], w1p, b1p, w2p, lp["b2"])
    return x


# --------------------------- params & reference --------------------------------


def init_params(key, dim, depth, heads, dim_head, mult=4):
    inner = heads * dim_head
    hidden = dim * mult
    bf16 = jnp.bfloat16
    layers = []
    for _ in range(depth):
        key, k0, k1, k2, k3, k4, k5 = jax.random.split(key, 7)
        w1 = jax.random.normal(k2, (dim, hidden * 2), jnp.float32) * dim ** -0.5
        b1 = jax.random.normal(k3, (1, hidden * 2), jnp.float32) * 0.01
        layers.append(dict(
            ln1_g=jnp.ones((1, dim), jnp.float32),
            ln1_b=jnp.zeros((1, dim), jnp.float32),
            wqkv=(jax.random.normal(k0, (dim, inner * 3), jnp.float32)
                  * dim ** -0.5).astype(bf16),
            wout=(jax.random.normal(k1, (inner, dim), jnp.float32)
                  * inner ** -0.5).astype(bf16),
            ln2_g=jnp.ones((1, dim), jnp.float32),
            ln2_b=jnp.zeros((1, dim), jnp.float32),
            # GEGLU halves of w1/b1 kept split; packed per hidden tile in wrapper.
            wa=w1[:, :hidden].astype(bf16),
            wg=w1[:, hidden:].astype(bf16),
            ba=b1[:, :hidden],
            bg=b1[:, hidden:],
            w2=(jax.random.normal(k4, (hidden, dim), jnp.float32)
                * hidden ** -0.5).astype(bf16),
            b2=jax.random.normal(k5, (1, dim), jnp.float32) * 0.01,
        ))
    return layers


def reference_forward(x, params, heads, dim_head, positions=None, *,
                      approx_gelu=True):
    """Pure-JAX reference mirroring the kernel's precision strategy
    (bf16 inter-layer activations, bf16 matmuls with f32 accumulation)."""
    B, N, D = x.shape
    f32, bf16 = jnp.float32, jnp.bfloat16
    if positions is not None:
        x = x + sin_cos_pos_emb(positions, D).astype(x.dtype)
    x = x.astype(bf16)
    inner = heads * dim_head
    scale = dim_head ** -0.5
    for lp in params:
        xf = x.astype(f32)
        xn = _layernorm(xf, lp["ln1_g"], lp["ln1_b"])
        qkv = jnp.dot(xn.astype(bf16), lp["wqkv"], preferred_element_type=f32)
        q, k, v = jnp.split(qkv, 3, axis=-1)
        q = q.reshape(B, N, heads, dim_head).transpose(0, 2, 1, 3) * scale
        k = k.reshape(B, N, heads, dim_head).transpose(0, 2, 1, 3)
        v = v.reshape(B, N, heads, dim_head).transpose(0, 2, 1, 3)
        sim = jnp.einsum("bhid,bhjd->bhij", q.astype(bf16), k.astype(bf16),
                         preferred_element_type=f32)
        attn = jax.nn.softmax(sim, axis=-1)
        out = jnp.einsum("bhij,bhjd->bhid", attn.astype(bf16), v.astype(bf16),
                         preferred_element_type=f32)
        out = out.transpose(0, 2, 1, 3).reshape(B, N, inner)
        y = jnp.dot(out.astype(bf16), lp["wout"], preferred_element_type=f32) + xf

        xn2 = _layernorm(y, lp["ln2_g"], lp["ln2_b"]).astype(bf16)
        a = jnp.dot(xn2, lp["wa"], preferred_element_type=f32) + lp["ba"]
        g = jnp.dot(xn2, lp["wg"], preferred_element_type=f32) + lp["bg"]
        act = a * jax.nn.gelu(g, approximate=approx_gelu)
        y = jnp.dot(act.astype(bf16), lp["w2"],
                    preferred_element_type=f32) + lp["b2"] + y
        x = y.astype(bf16)
    return x


if __name__ == "__main__":
    dim, depth, heads, dim_head = 32, 2, 4, 8
    B, N = 2, 8

    key = jax.random.PRNGKey(0)
    kx, kp = jax.random.split(key)
    x = jax.random.normal(kx, (B, N, dim), jnp.float32)
    positions = jnp.broadcast_to(jnp.arange(N, dtype=jnp.float32), (B, N))
    params = init_params(kp, dim, depth, heads, dim_head)

    out = transformer_forward(x, params, heads, dim_head, positions=positions)
    out = jax.block_until_ready(out)

    ref = reference_forward(x, params, heads, dim_head, positions=positions)
    np.testing.assert_allclose(np.asarray(out, dtype=np.float32),
                               np.asarray(ref, dtype=np.float32),
                               rtol=2e-2, atol=2e-2)
    print("KERNEL_OK")
</pallas_src>

<mosaic_0001>
module attributes {stable_mosaic.version = 11 : i64} {
  func.func @_transformer_layer_kernel(%arg0: i32, %arg1: i32, %arg2: memref<1x8x32xbf16, #tpu.memory_space<vmem>>, %arg3: memref<1x32xf32, #tpu.memory_space<vmem>>, %arg4: memref<1x32xf32, #tpu.memory_space<vmem>>, %arg5: memref<32x96xbf16, #tpu.memory_space<vmem>>, %arg6: memref<32x32xbf16, #tpu.memory_space<vmem>>, %arg7: memref<1x32xf32, #tpu.memory_space<vmem>>, %arg8: memref<1x32xf32, #tpu.memory_space<vmem>>, %arg9: memref<1x32x256xbf16, #tpu.memory_space<vmem>>, %arg10: memref<1x1x256xf32, #tpu.memory_space<vmem>>, %arg11: memref<1x128x32xbf16, #tpu.memory_space<vmem>>, %arg12: memref<1x32xf32, #tpu.memory_space<vmem>>, %arg13: memref<1x8x32xbf16, #tpu.memory_space<vmem>>, %arg14: memref<8x32xbf16, #tpu.memory_space<vmem>>, %arg15: memref<8x32xf32, #tpu.memory_space<vmem>>) attributes {dimension_semantics = [#tpu.dimension_semantics<parallel>, #tpu.dimension_semantics<arbitrary>], iteration_bounds = array<i64: 2, 1>, scalar_prefetch = 0 : i64, scratch_operands = 2 : i64, tpu.core_type = #tpu.core_type<tc>, window_params = [{transform_indices = @transform_0, window_bounds = array<i64: 1, 8, 32>}, {pipeline_mode = #tpu.pipeline_mode<synchronous>, transform_indices = @transform_1, window_bounds = array<i64: 1, 32>}, {pipeline_mode = #tpu.pipeline_mode<synchronous>, transform_indices = @transform_2, window_bounds = array<i64: 1, 32>}, {pipeline_mode = #tpu.pipeline_mode<synchronous>, transform_indices = @transform_3, window_bounds = array<i64: 32, 96>}, {pipeline_mode = #tpu.pipeline_mode<synchronous>, transform_indices = @transform_4, window_bounds = array<i64: 32, 32>}, {pipeline_mode = #tpu.pipeline_mode<synchronous>, transform_indices = @transform_5, window_bounds = array<i64: 1, 32>}, {pipeline_mode = #tpu.pipeline_mode<synchronous>, transform_indices = @transform_6, window_bounds = array<i64: 1, 32>}, {transform_indices = @transform_7, window_bounds = array<i64: 1, 32, 256>}, {transform_indices = @transform_8, window_bounds = array<i64: 1, 1, 256>}, {transform_indices = @transform_9, window_bounds = array<i64: 1, 128, 32>}, {pipeline_mode = #tpu.pipeline_mode<synchronous>, transform_indices = @transform_10, window_bounds = array<i64: 1, 32>}, {transform_indices = @transform_11, window_bounds = array<i64: 1, 8, 32>}]} {
    %c0_i32 = arith.constant 0 : i32
    %0 = arith.cmpi eq, %arg1, %c0_i32 : i32
    %1 = arith.extui %0 : i1 to i32
    %c0_i32_0 = arith.constant 0 : i32
    %2 = arith.cmpi ne, %1, %c0_i32_0 : i32
    scf.if %2 {
      %c0_22 = arith.constant 0 : index
      %c0_23 = arith.constant 0 : index
      %c0_24 = arith.constant 0 : index
      %37 = vector.load %arg2[%c0_22, %c0_23, %c0_24] : memref<1x8x32xbf16, #tpu.memory_space<vmem>>, vector<1x8x32xbf16>
      %38 = vector.shape_cast %37 : vector<1x8x32xbf16> to vector<8x32xbf16>
      %39 = arith.extf %38 : vector<8x32xbf16> to vector<8x32xf32>
      %c0_25 = arith.constant 0 : index
      %c0_26 = arith.constant 0 : index
      %40 = vector.load %arg3[%c0_25, %c0_26] : memref<1x32xf32, #tpu.memory_space<vmem>>, vector<1x32xf32>
      %c0_27 = arith.constant 0 : index
      %c0_28 = arith.constant 0 : index
      %41 = vector.load %arg4[%c0_27, %c0_28] : memref<1x32xf32, #tpu.memory_space<vmem>>, vector<1x32xf32>
      %cst_29 = arith.constant dense<0.000000e+00> : vector<8xf32>
      %42 = vector.multi_reduction <add>, %39, %cst_29 [1] : vector<8x32xf32> to vector<8xf32>
      %43 = vector.shape_cast %42 : vector<8xf32> to vector<8x1xf32>
      %cst_30 = arith.constant 3.200000e+01 : f32
      %44 = vector.broadcast %cst_30 : f32 to vector<8x1xf32>
      %45 = arith.divf %43, %44 : vector<8x1xf32>
      %46 = vector.broadcast %45 : vector<8x1xf32> to vector<8x32xf32>
      %47 = arith.subf %39, %46 : vector<8x32xf32>
      %48 = arith.mulf %47, %47 : vector<8x32xf32>
      %cst_31 = arith.constant dense<0.000000e+00> : vector<8xf32>
      %49 = vector.multi_reduction <add>, %48, %cst_31 [1] : vector<8x32xf32> to vector<8xf32>
      %50 = vector.shape_cast %49 : vector<8xf32> to vector<8x1xf32>
      %cst_32 = arith.constant 3.200000e+01 : f32
      %51 = vector.broadcast %cst_32 : f32 to vector<8x1xf32>
      %52 = arith.divf %50, %51 : vector<8x1xf32>
      %53 = vector.broadcast %45 : vector<8x1xf32> to vector<8x32xf32>
      %54 = arith.subf %39, %53 : vector<8x32xf32>
      %cst_33 = arith.constant 9.99999974E-6 : f32
      %55 = vector.broadcast %cst_33 : f32 to vector<8x1xf32>
      %56 = arith.addf %52, %55 : vector<8x1xf32>
      %57 = math.rsqrt %56 : vector<8x1xf32>
      %58 = vector.broadcast %57 : vector<8x1xf32> to vector<8x32xf32>
      %59 = arith.mulf %54, %58 : vector<8x32xf32>
      %60 = vector.broadcast %40 : vector<1x32xf32> to vector<8x32xf32>
      %61 = arith.mulf %59, %60 : vector<8x32xf32>
      %62 = vector.broadcast %41 : vector<1x32xf32> to vector<8x32xf32>
      %63 = arith.addf %61, %62 : vector<8x32xf32>
      %64 = arith.truncf %63 : vector<8x32xf32> to vector<8x32xbf16>
      %c0_34 = arith.constant 0 : index
      %c0_35 = arith.constant 0 : index
      %65 = vector.load %arg5[%c0_34, %c0_35] : memref<32x96xbf16, #tpu.memory_space<vmem>>, vector<32x96xbf16>
      %cst_36 = arith.constant dense<0.000000e+00> : vector<8x96xf32>
      %66 = tpu.matmul %64, %65, %cst_36 {dimension_numbers = #tpu.dot_dimension_numbers<[1], [0], [0], [1], [0, 0, 1, 1], [], []>} : vector<8x32xbf16>, vector<32x96xbf16>, vector<8x96xf32> -> vector<8x96xf32>
      %67 = vector.extract_strided_slice %66 {offsets = [0, 0], sizes = [8, 8], strides = [1, 1]} : vector<8x96xf32> to vector<8x8xf32>
      %68 = vector.extract_strided_slice %66 {offsets = [0, 8], sizes = [8, 8], strides = [1, 1]} : vector<8x96xf32> to vector<8x8xf32>
      %69 = vector.extract_strided_slice %66 {offsets = [0, 16], sizes = [8, 8], strides = [1, 1]} : vector<8x96xf32> to vector<8x8xf32>
      %70 = vector.extract_strided_slice %66 {offsets = [0, 24], sizes = [8, 8], strides = [1, 1]} : vector<8x96xf32> to vector<8x8xf32>
      %71 = vector.shape_cast %67 : vector<8x8xf32> to vector<1x8x8xf32>
      %72 = vector.shape_cast %68 : vector<8x8xf32> to vector<1x8x8xf32>
      %73 = vector.shape_cast %69 : vector<8x8xf32> to vector<1x8x8xf32>
      %74 = vector.shape_cast %70 : vector<8x8xf32> to vector<1x8x8xf32>
      %75 = tpu.concatenate %71, %72, %73, %74 in 0 : vector<1x8x8xf32>, vector<1x8x8xf32>, vector<1x8x8xf32>, vector<1x8x8xf32> -> vector<4x8x8xf32>
      %cst_37 = arith.constant 0.353553385 : f32
      %76 = vector.broadcast %cst_37 : f32 to vector<4x8x8xf32>
      %77 = arith.mulf %75, %76 : vector<4x8x8xf32>
      %78 = arith.truncf %77 : vector<4x8x8xf32> to vector<4x8x8xbf16>
      %79 = vector.extract_strided_slice %66 {offsets = [0, 32], sizes = [8, 8], strides = [1, 1]} : vector<8x96xf32> to vector<8x8xf32>
      %80 = vector.extract_strided_slice %66 {offsets = [0, 40], sizes = [8, 8], strides = [1, 1]} : vector<8x96xf32> to vector<8x8xf32>
      %81 = vector.extract_strided_slice %66 {offsets = [0, 48], sizes = [8, 8], strides = [1, 1]} : vector<8x96xf32> to vector<8x8xf32>
      %82 = vector.extract_strided_slice %66 {offsets = [0, 56], sizes = [8, 8], strides = [1, 1]} : vector<8x96xf32> to vector<8x8xf32>
      %83 = vector.shape_cast %79 : vector<8x8xf32> to vector<1x8x8xf32>
      %84 = vector.shape_cast %80 : vector<8x8xf32> to vector<1x8x8xf32>
      %85 = vector.shape_cast %81 : vector<8x8xf32> to vector<1x8x8xf32>
      %86 = vector.shape_cast %82 : vector<8x8xf32> to vector<1x8x8xf32>
      %87 = tpu.concatenate %83, %84, %85, %86 in 0 : vector<1x8x8xf32>, vector<1x8x8xf32>, vector<1x8x8xf32>, vector<1x8x8xf32> -> vector<4x8x8xf32>
      %88 = arith.truncf %87 : vector<4x8x8xf32> to vector<4x8x8xbf16>
      %89 = vector.extract_strided_slice %66 {offsets = [0, 64], sizes = [8, 8], strides = [1, 1]} : vector<8x96xf32> to vector<8x8xf32>
      %90 = vector.extract_strided_slice %66 {offsets = [0, 72], sizes = [8, 8], strides = [1, 1]} : vector<8x96xf32> to vector<8x8xf32>
      %91 = vector.extract_strided_slice %66 {offsets = [0, 80], sizes = [8, 8], strides = [1, 1]} : vector<8x96xf32> to vector<8x8xf32>
      %92 = vector.extract_strided_slice %66 {offsets = [0, 88], sizes = [8, 8], strides = [1, 1]} : vector<8x96xf32> to vector<8x8xf32>
      %93 = vector.shape_cast %89 : vector<8x8xf32> to vector<1x8x8xf32>
      %94 = vector.shape_cast %90 : vector<8x8xf32> to vector<1x8x8xf32>
      %95 = vector.shape_cast %91 : vector<8x8xf32> to vector<1x8x8xf32>
      %96 = vector.shape_cast %92 : vector<8x8xf32> to vector<1x8x8xf32>
      %97 = tpu.concatenate %93, %94, %95, %96 in 0 : vector<1x8x8xf32>, vector<1x8x8xf32>, vector<1x8x8xf32>, vector<1x8x8xf32> -> vector<4x8x8xf32>
      %98 = arith.truncf %97 : vector<4x8x8xf32> to vector<4x8x8xbf16>
      %c0_38 = arith.constant 0 : index
      %c0_39 = arith.constant 0 : index
      %99 = vector.load %arg6[%c0_38, %c0_39] : memref<32x32xbf16, #tpu.memory_space<vmem>>, vector<32x32xbf16>
      %cst_40 = arith.constant 0xFF800000 : f32
      %100 = vector.broadcast %cst_40 : f32 to vector<4x8x1xf32>
      %cst_41 = arith.constant 0.000000e+00 : f32
      %101 = vector.broadcast %cst_41 : f32 to vector<4x8x1xf32>
      %cst_42 = arith.constant 0.000000e+00 : f32
      %102 = vector.broadcast %cst_42 : f32 to vector<4x8x8xf32>
      "tpu.trace_start"() <{level = 10 : i32, message = "hqd,hkd->hqk"}> : () -> ()
      %cst_43 = arith.constant dense<0.000000e+00> : vector<4x8x8xf32>
      %103 = tpu.matmul %78, %88, %cst_43 {dimension_numbers = #tpu.dot_dimension_numbers<[2], [2], [1], [1], [0, 0, 0, 1, 1, 1], [0], [0]>} : vector<4x8x8xbf16>, vector<4x8x8xbf16>, vector<4x8x8xf32> -> vector<4x8x8xf32>
      "tpu.trace_stop"() : () -> ()
      %cst_44 = arith.constant dense<0xFF800000> : vector<4x8xf32>
      %104 = vector.multi_reduction <maximumf>, %103, %cst_44 [2] : vector<4x8x8xf32> to vector<4x8xf32>
      %105 = vector.shape_cast %104 : vector<4x8xf32> to vector<4x8x1xf32>
      %106 = arith.maximumf %100, %105 : vector<4x8x1xf32>
      %107 = arith.subf %100, %106 : vector<4x8x1xf32>
      %108 = math.exp %107 : vector<4x8x1xf32>
      %109 = vector.broadcast %106 : vector<4x8x1xf32> to vector<4x8x8xf32>
      %110 = arith.subf %103, %109 : vector<4x8x8xf32>
      %111 = math.exp %110 : vector<4x8x8xf32>
      %112 = arith.mulf %108, %101 : vector<4x8x1xf32>
      %cst_45 = arith.constant dense<0.000000e+00> : vector<4x8xf32>
      %113 = vector.multi_reduction <add>, %111, %cst_45 [2] : vector<4x8x8xf32> to vector<4x8xf32>
      %114 = vector.shape_cast %113 : vector<4x8xf32> to vector<4x8x1xf32>
      %115 = arith.addf %112, %114 : vector<4x8x1xf32>
      %116 = vector.broadcast %108 : vector<4x8x1xf32> to vector<4x8x8xf32>
      %117 = arith.mulf %116, %102 : vector<4x8x8xf32>
      %118 = arith.truncf %111 : vector<4x8x8xf32> to vector<4x8x8xbf16>
      "tpu.trace_start"() <{level = 10 : i32, message = "hqk,hkd->hqd"}> : () -> ()
      %cst_46 = arith.constant dense<0.000000e+00> : vector<4x8x8xf32>
      %119 = tpu.matmul %118, %98, %cst_46 {dimension_numbers = #tpu.dot_dimension_numbers<[2], [1], [1], [2], [0, 0, 0, 1, 1, 2], [0], [0]>} : vector<4x8x8xbf16>, vector<4x8x8xbf16>, vector<4x8x8xf32> -> vector<4x8x8xf32>
      "tpu.trace_stop"() : () -> ()
      %120 = arith.addf %117, %119 : vector<4x8x8xf32>
      %121 = tpu.reciprocal %115 {approx = true} : vector<4x8x1xf32> -> vector<4x8x1xf32>
      %122 = arith.mulf %115, %121 : vector<4x8x1xf32>
      %cst_47 = arith.constant 2.000000e+00 : f32
      %123 = vector.broadcast %cst_47 : f32 to vector<4x8x1xf32>
      %124 = arith.subf %123, %122 : vector<4x8x1xf32>
      %125 = arith.mulf %121, %124 : vector<4x8x1xf32>
      %126 = vector.broadcast %125 : vector<4x8x1xf32> to vector<4x8x8xf32>
      %127 = arith.mulf %120, %126 : vector<4x8x8xf32>
      %128 = vector.extract_strided_slice %127 {offsets = [0, 0, 0], sizes = [1, 8, 8], strides = [1, 1, 1]} : vector<4x8x8xf32> to vector<1x8x8xf32>
      %129 = vector.shape_cast %128 : vector<1x8x8xf32> to vector<8x8xf32>
      %130 = vector.extract_strided_slice %127 {offsets = [1, 0, 0], sizes = [1, 8, 8], strides = [1, 1, 1]} : vector<4x8x8xf32> to vector<1x8x8xf32>
      %131 = vector.shape_cast %130 : vector<1x8x8xf32> to vector<8x8xf32>
      %132 = vector.extract_strided_slice %127 {offsets = [2, 0, 0], sizes = [1, 8, 8], strides = [1, 1, 1]} : vector<4x8x8xf32> to vector<1x8x8xf32>
      %133 = vector.shape_cast %132 : vector<1x8x8xf32> to vector<8x8xf32>
      %134 = vector.extract_strided_slice %127 {offsets = [3, 0, 0], sizes = [1, 8, 8], strides = [1, 1, 1]} : vector<4x8x8xf32> to vector<1x8x8xf32>
      %135 = vector.shape_cast %134 : vector<1x8x8xf32> to vector<8x8xf32>
      %136 = tpu.concatenate %129, %131, %133, %135 in 1 : vector<8x8xf32>, vector<8x8xf32>, vector<8x8xf32>, vector<8x8xf32> -> vector<8x32xf32>
      %137 = arith.truncf %136 : vector<8x32xf32> to vector<8x32xbf16>
      %cst_48 = arith.constant dense<0.000000e+00> : vector<8x32xf32>
      %138 = tpu.matmul %137, %99, %cst_48 {dimension_numbers = #tpu.dot_dimension_numbers<[1], [0], [0], [1], [0, 0, 1, 1], [], []>} : vector<8x32xbf16>, vector<32x32xbf16>, vector<8x32xf32> -> vector<8x32xf32>
      %139 = arith.addf %138, %39 : vector<8x32xf32>
      %c0_49 = arith.constant 0 : index
      %c0_50 = arith.constant 0 : index
      %140 = vector.load %arg7[%c0_49, %c0_50] : memref<1x32xf32, #tpu.memory_space<vmem>>, vector<1x32xf32>
      %c0_51 = arith.constant 0 : index
      %c0_52 = arith.constant 0 : index
      %141 = vector.load %arg8[%c0_51, %c0_52] : memref<1x32xf32, #tpu.memory_space<vmem>>, vector<1x32xf32>
      %cst_53 = arith.constant dense<0.000000e+00> : vector<8xf32>
      %142 = vector.multi_reduction <add>, %139, %cst_53 [1] : vector<8x32xf32> to vector<8xf32>
      %143 = vector.shape_cast %142 : vector<8xf32> to vector<8x1xf32>
      %cst_54 = arith.constant 3.200000e+01 : f32
      %144 = vector.broadcast %cst_54 : f32 to vector<8x1xf32>
      %145 = arith.divf %143, %144 : vector<8x1xf32>
      %146 = vector.broadcast %145 : vector<8x1xf32> to vector<8x32xf32>
      %147 = arith.subf %139, %146 : vector<8x32xf32>
      %148 = arith.mulf %147, %147 : vector<8x32xf32>
      %cst_55 = arith.constant dense<0.000000e+00> : vector<8xf32>
      %149 = vector.multi_reduction <add>, %148, %cst_55 [1] : vector<8x32xf32> to vector<8xf32>
      %150 = vector.shape_cast %149 : vector<8xf32> to vector<8x1xf32>
      %cst_56 = arith.constant 3.200000e+01 : f32
      %151 = vector.broadcast %cst_56 : f32 to vector<8x1xf32>
      %152 = arith.divf %150, %151 : vector<8x1xf32>
      %153 = vector.broadcast %145 : vector<8x1xf32> to vector<8x32xf32>
      %154 = arith.subf %139, %153 : vector<8x32xf32>
      %cst_57 = arith.constant 9.99999974E-6 : f32
      %155 = vector.broadcast %cst_57 : f32 to vector<8x1xf32>
      %156 = arith.addf %152, %155 : vector<8x1xf32>
      %157 = math.rsqrt %156 : vector<8x1xf32>
      %158 = vector.broadcast %157 : vector<8x1xf32> to vector<8x32xf32>
      %159 = arith.mulf %154, %158 : vector<8x32xf32>
      %160 = vector.broadcast %140 : vector<1x32xf32> to vector<8x32xf32>
      %161 = arith.mulf %159, %160 : vector<8x32xf32>
      %162 = vector.broadcast %141 : vector<1x32xf32> to vector<8x32xf32>
      %163 = arith.addf %161, %162 : vector<8x32xf32>
      %164 = arith.truncf %163 : vector<8x32xf32> to vector<8x32xbf16>
      %c0_58 = arith.constant 0 : index
      %c0_59 = arith.constant 0 : index
      %165 = vector.load %arg14[%c0_58, %c0_59] : memref<8x32xbf16, #tpu.memory_space<vmem>>, vector<8x32xbf16>
      tpu.vector_store %arg14[%c0_58, %c0_59], %164 {strides = array<i32>} : memref<8x32xbf16, #tpu.memory_space<vmem>>, vector<8x32xbf16>,
      %c0_60 = arith.constant 0 : index
      %c0_61 = arith.constant 0 : index
      %166 = vector.load %arg12[%c0_60, %c0_61] : memref<1x32xf32, #tpu.memory_space<vmem>>, vector<1x32xf32>
      %167 = vector.broadcast %166 : vector<1x32xf32> to vector<8x32xf32>
      %168 = arith.addf %139, %167 : vector<8x32xf32>
      %c0_62 = arith.constant 0 : index
      %c0_63 = arith.constant 0 : index
      %169 = vector.load %arg15[%c0_62, %c0_63] : memref<8x32xf32, #tpu.memory_space<vmem>>, vector<8x32xf32>
      tpu.vector_store %arg15[%c0_62, %c0_63], %168 {strides = array<i32>} : memref<8x32xf32, #tpu.memory_space<vmem>>, vector<8x32xf32>,
    } else {
    }
    %c0 = arith.constant 0 : index
    %c0_1 = arith.constant 0 : index
    %3 = vector.load %arg14[%c0, %c0_1] : memref<8x32xbf16, #tpu.memory_space<vmem>>, vector<8x32xbf16>
    %c0_2 = arith.constant 0 : index
    %c0_3 = arith.constant 0 : index
    %c0_4 = arith.constant 0 : index
    %4 = vector.load %arg9[%c0_2, %c0_3, %c0_4] : memref<1x32x256xbf16, #tpu.memory_space<vmem>>, vector<1x32x256xbf16>
    %5 = vector.shape_cast %4 : vector<1x32x256xbf16> to vector<32x256xbf16>
    %cst = arith.constant dense<0.000000e+00> : vector<8x256xf32>
    %6 = tpu.matmul %3, %5, %cst {dimension_numbers = #tpu.dot_dimension_numbers<[1], [0], [0], [1], [0, 0, 1, 1], [], []>} : vector<8x32xbf16>, vector<32x256xbf16>, vector<8x256xf32> -> vector<8x256xf32>
    %c0_5 = arith.constant 0 : index
    %c0_6 = arith.constant 0 : index
    %c0_7 = arith.constant 0 : index
    %7 = vector.load %arg10[%c0_5, %c0_6, %c0_7] : memref<1x1x256xf32, #tpu.memory_space<vmem>>, vector<1x1x256xf32>
    %8 = vector.shape_cast %7 : vector<1x1x256xf32> to vector<1x256xf32>
    %9 = vector.broadcast %8 : vector<1x256xf32> to vector<8x256xf32>
    %10 = arith.addf %6, %9 : vector<8x256xf32>
    %11 = vector.extract_strided_slice %10 {offsets = [0, 0], sizes = [8, 128], strides = [1, 1]} : vector<8x256xf32> to vector<8x128xf32>
    %12 = vector.extract_strided_slice %10 {offsets = [0, 128], sizes = [8, 128], strides = [1, 1]} : vector<8x256xf32> to vector<8x128xf32>
    %13 = arith.mulf %12, %12 : vector<8x128xf32>
    %14 = arith.mulf %12, %13 : vector<8x128xf32>
    %cst_8 = arith.constant 4.471500e-02 : f32
    %15 = vector.broadcast %cst_8 : f32 to vector<8x128xf32>
    %16 = arith.mulf %15, %14 : vector<8x128xf32>
    %17 = arith.addf %12, %16 : vector<8x128xf32>
    %cst_9 = arith.constant 0.797884583 : f32
    %18 = vector.broadcast %cst_9 : f32 to vector<8x128xf32>
    %19 = arith.mulf %18, %17 : vector<8x128xf32>
    %20 = math.tanh %19 : vector<8x128xf32>
    %cst_10 = arith.constant 1.000000e+00 : f32
    %21 = vector.broadcast %cst_10 : f32 to vector<8x128xf32>
    %22 = arith.addf %21, %20 : vector<8x128xf32>
    %cst_11 = arith.constant 5.000000e-01 : f32
    %23 = vector.broadcast %cst_11 : f32 to vector<8x128xf32>
    %24 = arith.mulf %23, %22 : vector<8x128xf32>
    %25 = arith.mulf %12, %24 : vector<8x128xf32>
    %26 = arith.mulf %11, %25 : vector<8x128xf32>
    %c0_12 = arith.constant 0 : index
    %c0_13 = arith.constant 0 : index
    %27 = vector.load %arg15[%c0_12, %c0_13] : memref<8x32xf32, #tpu.memory_space<vmem>>, vector<8x32xf32>
    %28 = arith.truncf %26 : vector<8x128xf32> to vector<8x128xbf16>
    %c0_14 = arith.constant 0 : index
    %c0_15 = arith.constant 0 : index
    %c0_16 = arith.constant 0 : index
    %29 = vector.load %arg11[%c0_14, %c0_15, %c0_16] : memref<1x128x32xbf16, #tpu.memory_space<vmem>>, vector<1x128x32xbf16>
    %30 = vector.shape_cast %29 : vector<1x128x32xbf16> to vector<128x32xbf16>
    %cst_17 = arith.constant dense<0.000000e+00> : vector<8x32xf32>
    %31 = tpu.matmul %28, %30, %cst_17 {dimension_numbers = #tpu.dot_dimension_numbers<[1], [0], [0], [1], [0, 0, 1, 1], [], []>} : vector<8x128xbf16>, vector<128x32xbf16>, vector<8x32xf32> -> vector<8x32xf32>
    %32 = arith.addf %27, %31 : vector<8x32xf32>
    %c0_18 = arith.constant 0 : index
    %c0_19 = arith.constant 0 : index
    %33 = vector.load %arg15[%c0_18, %c0_19] : memref<8x32xf32, #tpu.memory_space<vmem>>, vector<8x32xf32>
    tpu.vector_store %arg15[%c0_18, %c0_19], %32 {strides = array<i32>} : memref<8x32xf32, #tpu.memory_space<vmem>>, vector<8x32xf32>,
    %c0_i32_20 = arith.constant 0 : i32
    %34 = arith.cmpi eq, %arg1, %c0_i32_20 : i32
    %35 = arith.extui %34 : i1 to i32
    %c0_i32_21 = arith.constant 0 : i32
    %36 = arith.cmpi ne, %35, %c0_i32_21 : i32
    scf.if %36 {
      %c0_22 = arith.constant 0 : index
      %c0_23 = arith.constant 0 : index
      %37 = vector.load %arg15[%c0_22, %c0_23] : memref<8x32xf32, #tpu.memory_space<vmem>>, vector<8x32xf32>
      %38 = arith.truncf %37 : vector<8x32xf32> to vector<8x32xbf16>
      %c0_24 = arith.constant 0 : index
      %c0_25 = arith.constant 0 : index
      %c0_26 = arith.constant 0 : index
      %39 = vector.load %arg13[%c0_24, %c0_25, %c0_26] : memref<1x8x32xbf16, #tpu.memory_space<vmem>>, vector<1x8x32xbf16>
      %40 = vector.shape_cast %39 : vector<1x8x32xbf16> to vector<8x32xbf16>
      %41 = vector.shape_cast %38 : vector<8x32xbf16> to vector<1x8x32xbf16>
      tpu.vector_store %arg13[%c0_24, %c0_25, %c0_26], %41 {strides = array<i32>} : memref<1x8x32xbf16, #tpu.memory_space<vmem>>, vector<1x8x32xbf16>,
    } else {
    }
    return
  }
  func.func @transform_0(%arg0: i32, %arg1: i32) -> (i32, i32, i32) {
    %c0_i32 = arith.constant 0 : i32
    %c0_i32_0 = arith.constant 0 : i32
    %c0_i32_1 = arith.constant 0 : i32
    return %arg0, %c0_i32, %c0_i32_0 : i32, i32, i32
  }
  func.func @transform_1(%arg0: i32, %arg1: i32) -> (i32, i32) {
    %c0_i32 = arith.constant 0 : i32
    %c0_i32_0 = arith.constant 0 : i32
    %c0_i32_1 = arith.constant 0 : i32
    return %c0_i32, %c0_i32_0 : i32, i32
  }
  func.func @transform_2(%arg0: i32, %arg1: i32) -> (i32, i32) {
    %c0_i32 = arith.constant 0 : i32
    %c0_i32_0 = arith.constant 0 : i32
    %c0_i32_1 = arith.constant 0 : i32
    return %c0_i32, %c0_i32_0 : i32, i32
  }
  func.func @transform_3(%arg0: i32, %arg1: i32) -> (i32, i32) {
    %c0_i32 = arith.constant 0 : i32
    %c0_i32_0 = arith.constant 0 : i32
    %c0_i32_1 = arith.constant 0 : i32
    return %c0_i32, %c0_i32_0 : i32, i32
  }
  func.func @transform_4(%arg0: i32, %arg1: i32) -> (i32, i32) {
    %c0_i32 = arith.constant 0 : i32
    %c0_i32_0 = arith.constant 0 : i32
    %c0_i32_1 = arith.constant 0 : i32
    return %c0_i32, %c0_i32_0 : i32, i32
  }
  func.func @transform_5(%arg0: i32, %arg1: i32) -> (i32, i32) {
    %c0_i32 = arith.constant 0 : i32
    %c0_i32_0 = arith.constant 0 : i32
    %c0_i32_1 = arith.constant 0 : i32
    return %c0_i32, %c0_i32_0 : i32, i32
  }
  func.func @transform_6(%arg0: i32, %arg1: i32) -> (i32, i32) {
    %c0_i32 = arith.constant 0 : i32
    %c0_i32_0 = arith.constant 0 : i32
    %c0_i32_1 = arith.constant 0 : i32
    return %c0_i32, %c0_i32_0 : i32, i32
  }
  func.func @transform_7(%arg0: i32, %arg1: i32) -> (i32, i32, i32) {
    %c0_i32 = arith.constant 0 : i32
    %c0_i32_0 = arith.constant 0 : i32
    %c0_i32_1 = arith.constant 0 : i32
    return %arg1, %c0_i32, %c0_i32_0 : i32, i32, i32
  }
  func.func @transform_8(%arg0: i32, %arg1: i32) -> (i32, i32, i32) {
    %c0_i32 = arith.constant 0 : i32
    %c0_i32_0 = arith.constant 0 : i32
    %c0_i32_1 = arith.constant 0 : i32
    return %arg1, %c0_i32, %c0_i32_0 : i32, i32, i32
  }
  func.func @transform_9(%arg0: i32, %arg1: i32) -> (i32, i32, i32) {
    %c0_i32 = arith.constant 0 : i32
    %c0_i32_0 = arith.constant 0 : i32
    %c0_i32_1 = arith.constant 0 : i32
    return %arg1, %c0_i32, %c0_i32_0 : i32, i32, i32
  }
  func.func @transform_10(%arg0: i32, %arg1: i32) -> (i32, i32) {
    %c0_i32 = arith.constant 0 : i32
    %c0_i32_0 = arith.constant 0 : i32
    %c0_i32_1 = arith.constant 0 : i32
    return %c0_i32, %c0_i32_0 : i32, i32
  }
  func.func @transform_11(%arg0: i32, %arg1: i32) -> (i32, i32, i32) {
    %c0_i32 = arith.constant 0 : i32
    %c0_i32_0 = arith.constant 0 : i32
    %c0_i32_1 = arith.constant 0 : i32
    return %arg0, %c0_i32, %c0_i32_0 : i32, i32, i32
  }
}

</mosaic_0001>

<llo_original>
// kernel: tpu_custom_call.1
$region0: #{tpu_custom_call.1}
  #allocation0 [shape = 'u32[]', space=smem, size = 0x4, offset = 0x4, fixed_abs, tag = 'smem constant byte address 0x4 - core index']
  #allocation1 [shape = 'u32[144,128]{1,0:T(1,128)}', space=vmem, size = 0x12000, scoped, tag = 'internal scratch']
  #allocation2 [shape = 'bf16[8,32]{1,0:T(8,128)(2,1)}', space=vmem, size = 0x800, scoped, tag = 'scratch operand']
  #allocation3 [shape = 'f32[8,32]{1,0:T(8,128)}', space=vmem, size = 0x1000, scoped, tag = 'scratch operand']
  %s0 = inlined_call_operand.vmem [shape: bf16[2,8,32], index: 0, kind: input, shape index: {}]
  %s1 = inlined_call_operand.vmem [shape: f32[1,32], index: 1, kind: input, shape index: {}]
  %s2 = inlined_call_operand.vmem [shape: f32[1,32], index: 2, kind: input, shape index: {}]
  %s3 = inlined_call_operand.vmem [shape: bf16[32,96], index: 3, kind: input, shape index: {}]
  %s4 = inlined_call_operand.vmem [shape: bf16[32,32], index: 4, kind: input, shape index: {}]
  %s5 = inlined_call_operand.vmem [shape: f32[1,32], index: 5, kind: input, shape index: {}]
  %s6 = inlined_call_operand.vmem [shape: f32[1,32], index: 6, kind: input, shape index: {}]
  %s7 = inlined_call_operand.vmem [shape: bf16[1,32,256], index: 7, kind: input, shape index: {}]
  %s8 = inlined_call_operand.vmem [shape: f32[1,1,256], index: 8, kind: input, shape index: {}]
  %s9 = inlined_call_operand.vmem [shape: bf16[1,128,32], index: 9, kind: input, shape index: {}]
  %s10 = inlined_call_operand.vmem [shape: f32[1,32], index: 10, kind: input, shape index: {}]
  %s11 = inlined_call_operand.hbm [shape: bf16[2,8,32], index: 11, kind: output, shape index: {}]
  %s12 = sld [smem:[#allocation0]]
  $region85: #{tpu_custom_call.1} parent=0
    _
  %s14 = ssub.s32 1, %s12
  %s15 = scalar_select 0, %s14, %s12
  $region1: #{tpu_custom_call.1} parent=0
    #allocation4 [shape = 'u8[4096]{0}', space=vmem, size = 0x1000, scoped, tag = 'output window, operand 0']
    #allocation5 [shape = 's32[2]{0}', space=sflag, size = 0x8, scoped, tag = 'scoped memory for tpu_custom_call.1']
    %16 = vsyncpa [#allocation5], 0
    %s17 = scalar_lea.sflag [#allocation5], 1
    %18 = vsyncpa %s17, 0
    loop: start=0, step=1, limit=4
    $region2: #{tpu_custom_call.1} parent=1 // loop_pre_header
      _
    $region3: #{tpu_custom_call.1} parent=1 // loop_header
      %s20 = sphi 0, %s24
      %p21 = scmp.ge.s32.totalorder %s20, 4
      %s27 = sphi 0, %s39
      %s28 = sphi 0, %s35
      %s29 = sphi 0, %s27
      %s30 = sphi 0, %s28
      %s31 = sphi 0, %s29
      %s32 = sphi 0, %s30
      %s42 = sphi 0, %s44
      %s45 = sphi 0, %s42
      %s46 = sphi 0, %s45
      %s62 = sphi 0, %s46
      %s66 = sphi 0, %s66
      %s68 = sphi 0, %s66
      %s69 = sphi 0, %s68
      %s83 = sphi 0, %s69
      %s87 = sphi 0, %s87
      %s89 = sphi 0, %s87
      %s90 = sphi 0, %s89
      %s104 = sphi 0, %s90
      %s108 = sphi 0, %s108
      %s110 = sphi 0, %s108
      %s111 = sphi 0, %s110
      %s125 = sphi 0, %s111
      %s129 = sphi 0, %s129
      %s131 = sphi 0, %s129
      %s132 = sphi 0, %s131
      %s146 = sphi 0, %s132
      %s150 = sphi 0, %s150
      %s152 = sphi 0, %s150
      %s153 = sphi 0, %s152
      %s167 = sphi 0, %s153
      %s171 = sphi 0, %s171
      %s173 = sphi 0, %s171
      %s174 = sphi 0, %s173
      %s188 = sphi 0, %s174
      %s194 = sphi 0, %s196
      %s197 = sphi 0, %s194
      %s198 = sphi 0, %s197
      %s214 = sphi 0, %s198
      %s220 = sphi 0, %s222
      %s223 = sphi 0, %s220
      %s224 = sphi 0, %s223
      %s240 = sphi 0, %s224
      %s246 = sphi 0, %s248
      %s249 = sphi 0, %s246
      %s250 = sphi 0, %s249
      %s266 = sphi 0, %s250
      %s270 = sphi 0, %s270
      %s272 = sphi 0, %s270
      %s273 = sphi 0, %s272
      %s287 = sphi 0, %s273
      %s293 = sphi 0, %s295
      %s296 = sphi 0, %s293
      %s297 = sphi 0, %s296
      %s313 = sphi 0, %s297
    $region4: #{tpu_custom_call.1} parent=1 // loop_header_branch
      %23 = sbr.rel (%p21) target = $region8
    $region5: #{tpu_custom_call.1} parent=1 // loop_body
      %s25 = ssub.s32 %s20, 1
      %s26 = ssub.s32 %s20, 2
      %s33 = sadd.s32 1, %s28
      %p34 = scmp.ge.s32.totalorder %s33, 1
      %s35 = scalar_select %p34, 0, %s33
      %s36 = sadd.s32 1, %s27
      %s37 = scalar_select %p34, %s36, %s27
      %p38 = scmp.ge.s32.totalorder %s37, 2
      %s39 = scalar_select %p38, 0, %s37
      %s40 = ssub.s32 %s27, %s39
      %p41 = scmp.eq.s32.totalorder %s40, 0
      %s43 = sadd.s32 %s42, 1
      %s44 = scalar_select %p41, %s42, %s43
      %p47 = pneg %p41
      %p48 = scmp.eq.s32.totalorder %s20, 1
      %p49 = por %p47, %p48
      %p50 = scmp.ne.s32.totalorder %s42, %s45
      %p51 = scmp.eq.s32.totalorder %s20, 0
      %p52 = por %p50, %p51
      %p53 = scmp.ne.s32.totalorder %s42, %s45
      %p54 = scmp.eq.s32.totalorder %s25, 1
      %p55 = por %p53, %p54
      %p56 = scmp.ne.s32.totalorder %s45, %s46
      %p57 = scmp.eq.s32.totalorder %s25, 0
      %p58 = por %p56, %p57
      %p59 = scmp.ne.s32.totalorder %s45, %s46
      %p60 = scmp.eq.s32.totalorder %s26, 1
      %p61 = por %p59, %p60
      %p63 = scmp.ne.s32.totalorder %s46, %s62
      %p64 = scmp.eq.s32.totalorder %s26, 0
      %p65 = por %p63, %p64
      %s67 = sadd.s32 %s66, 1
      %p70 = scmp.eq.s32.totalorder %s20, 1
      %p71 = scmp.ne.s32.totalorder %s66, %s68
      %p72 = scmp.eq.s32.totalorder %s20, 0
      %p73 = por %p71, %p72
      %p74 = scmp.ne.s32.totalorder %s66, %s68
      %p75 = scmp.eq.s32.totalorder %s25, 1
      %p76 = por %p74, %p75
      %p77 = scmp.ne.s32.totalorder %s68, %s69
      %p78 = scmp.eq.s32.totalorder %s25, 0
      %p79 = por %p77, %p78
      %p80 = scmp.ne.s32.totalorder %s68, %s69
      %p81 = scmp.eq.s32.totalorder %s26, 1
      %p82 = por %p80, %p81
      %p84 = scmp.ne.s32.totalorder %s69, %s83
      %p85 = scmp.eq.s32.totalorder %s26, 0
      %p86 = por %p84, %p85
      %s88 = sadd.s32 %s87, 1
      %p91 = scmp.eq.s32.totalorder %s20, 1
      %p92 = scmp.ne.s32.totalorder %s87, %s89
      %p93 = scmp.eq.s32.totalorder %s20, 0
      %p94 = por %p92, %p93
      %p95 = scmp.ne.s32.totalorder %s87, %s89
      %p96 = scmp.eq.s32.totalorder %s25, 1
      %p97 = por %p95, %p96
      %p98 = scmp.ne.s32.totalorder %s89, %s90
      %p99 = scmp.eq.s32.totalorder %s25, 0
      %p100 = por %p98, %p99
      %p101 = scmp.ne.s32.totalorder %s89, %s90
      %p102 = scmp.eq.s32.totalorder %s26, 1
      %p103 = por %p101, %p102
      %p105 = scmp.ne.s32.totalorder %s90, %s104
      %p106 = scmp.eq.s32.totalorder %s26, 0
      %p107 = por %p105, %p106
      %s109 = sadd.s32 %s108, 1
      %p112 = scmp.eq.s32.totalorder %s20, 1
      %p113 = scmp.ne.s32.totalorder %s108, %s110
      %p114 = scmp.eq.s32.totalorder %s20, 0
      %p115 = por %p113, %p114
      %p116 = scmp.ne.s32.totalorder %s108, %s110
      %p117 = scmp.eq.s32.totalorder %s25, 1
      %p118 = por %p116, %p117
      %p119 = scmp.ne.s32.totalorder %s110, %s111
      %p120 = scmp.eq.s32.totalorder %s25, 0
      %p121 = por %p119, %p120
      %p122 = scmp.ne.s32.totalorder %s110, %s111
      %p123 = scmp.eq.s32.totalorder %s26, 1
      %p124 = por %p122, %p123
      %p126 = scmp.ne.s32.totalorder %s111, %s125
      %p127 = scmp.eq.s32.totalorder %s26, 0
      %p128 = por %p126, %p127
      %s130 = sadd.s32 %s129, 1
      %p133 = scmp.eq.s32.totalorder %s20, 1
      %p134 = scmp.ne.s32.totalorder %s129, %s131
      %p135 = scmp.eq.s32.totalorder %s20, 0
      %p136 = por %p134, %p135
      %p137 = scmp.ne.s32.totalorder %s129, %s131
      %p138 = scmp.eq.s32.totalorder %s25, 1
      %p139 = por %p137, %p138
      %p140 = scmp.ne.s32.totalorder %s131, %s132
      %p141 = scmp.eq.s32.totalorder %s25, 0
      %p142 = por %p140, %p141
      %p143 = scmp.ne.s32.totalorder %s131, %s132
      %p144 = scmp.eq.s32.totalorder %s26, 1
      %p145 = por %p143, %p144
      %p147 = scmp.ne.s32.totalorder %s132, %s146
      %p148 = scmp.eq.s32.totalorder %s26, 0
      %p149 = por %p147, %p148
      %s151 = sadd.s32 %s150, 1
      %p154 = scmp.eq.s32.totalorder %s20, 1
      %p155 = scmp.ne.s32.totalorder %s150, %s152
      %p156 = scmp.eq.s32.totalorder %s20, 0
      %p157 = por %p155, %p156
      %p158 = scmp.ne.s32.totalorder %s150, %s152
      %p159 = scmp.eq.s32.totalorder %s25, 1
      %p160 = por %p158, %p159
      %p161 = scmp.ne.s32.totalorder %s152, %s153
      %p162 = scmp.eq.s32.totalorder %s25, 0
      %p163 = por %p161, %p162
      %p164 = scmp.ne.s32.totalorder %s152, %s153
      %p165 = scmp.eq.s32.totalorder %s26, 1
      %p166 = por %p164, %p165
      %p168 = scmp.ne.s32.totalorder %s153, %s167
      %p169 = scmp.eq.s32.totalorder %s26, 0
      %p170 = por %p168, %p169
      %s172 = sadd.s32 %s171, 1
      %p175 = scmp.eq.s32.totalorder %s20, 1
      %p176 = scmp.ne.s32.totalorder %s171, %s173
      %p177 = scmp.eq.s32.totalorder %s20, 0
      %p178 = por %p176, %p177
      %p179 = scmp.ne.s32.totalorder %s171, %s173
      %p180 = scmp.eq.s32.totalorder %s25, 1
      %p181 = por %p179, %p180
      %p182 = scmp.ne.s32.totalorder %s173, %s174
      %p183 = scmp.eq.s32.totalorder %s25, 0
      %p184 = por %p182, %p183
      %p185 = scmp.ne.s32.totalorder %s173, %s174
      %p186 = scmp.eq.s32.totalorder %s26, 1
      %p187 = por %p185, %p186
      %p189 = scmp.ne.s32.totalorder %s174, %s188
      %p190 = scmp.eq.s32.totalorder %s26, 0
      %p191 = por %p189, %p190
      %s192 = ssub.s32 %s28, %s35
      %p193 = scmp.eq.s32.totalorder %s192, 0
      %s195 = sadd.s32 %s194, 1
      %s196 = scalar_select %p193, %s194, %s195
      %p199 = pneg %p193
      %p200 = scmp.eq.s32.totalorder %s20, 1
      %p201 = por %p199, %p200
      %p202 = scmp.ne.s32.totalorder %s194, %s197
      %p203 = scmp.eq.s32.totalorder %s20, 0
      %p204 = por %p202, %p203
      %p205 = scmp.ne.s32.totalorder %s194, %s197
      %p206 = scmp.eq.s32.totalorder %s25, 1
      %p207 = por %p205, %p206
      %p208 = scmp.ne.s32.totalorder %s197, %s198
      %p209 = scmp.eq.s32.totalorder %s25, 0
      %p210 = por %p208, %p209
      %p211 = scmp.ne.s32.totalorder %s197, %s198
      %p212 = scmp.eq.s32.totalorder %s26, 1
      %p213 = por %p211, %p212
      %p215 = scmp.ne.s32.totalorder %s198, %s214
      %p216 = scmp.eq.s32.totalorder %s26, 0
      %p217 = por %p215, %p216
      %s218 = ssub.s32 %s28, %s35
      %p219 = scmp.eq.s32.totalorder %s218, 0
      %s221 = sadd.s32 %s220, 1
      %s222 = scalar_select %p219, %s220, %s221
      %p225 = pneg %p219
      %p226 = scmp.eq.s32.totalorder %s20, 1
      %p227 = por %p225, %p226
      %p228 = scmp.ne.s32.totalorder %s220, %s223
      %p229 = scmp.eq.s32.totalorder %s20, 0
      %p230 = por %p228, %p229
      %p231 = scmp.ne.s32.totalorder %s220, %s223
      %p232 = scmp.eq.s32.totalorder %s25, 1
      %p233 = por %p231, %p232
      %p234 = scmp.ne.s32.totalorder %s223, %s224
      %p235 = scmp.eq.s32.totalorder %s25, 0
      %p236 = por %p234, %p235
      %p237 = scmp.ne.s32.totalorder %s223, %s224
      %p238 = scmp.eq.s32.totalorder %s26, 1
      %p239 = por %p237, %p238
      %p241 = scmp.ne.s32.totalorder %s224, %s240
      %p242 = scmp.eq.s32.totalorder %s26, 0
      %p243 = por %p241, %p242
      %s244 = ssub.s32 %s28, %s35
      %p245 = scmp.eq.s32.totalorder %s244, 0
      %s247 = sadd.s32 %s246, 1
      %s248 = scalar_select %p245, %s246, %s247
      %p251 = pneg %p245
      %p252 = scmp.eq.s32.totalorder %s20, 1
      %p253 = por %p251, %p252
      %p254 = scmp.ne.s32.totalorder %s246, %s249
      %p255 = scmp.eq.s32.totalorder %s20, 0
      %p256 = por %p254, %p255
      %p257 = scmp.ne.s32.totalorder %s246, %s249
      %p258 = scmp.eq.s32.totalorder %s25, 1
      %p259 = por %p257, %p258
      %p260 = scmp.ne.s32.totalorder %s249, %s250
      %p261 = scmp.eq.s32.totalorder %s25, 0
      %p262 = por %p260, %p261
      %p263 = scmp.ne.s32.totalorder %s249, %s250
      %p264 = scmp.eq.s32.totalorder %s26, 1
      %p265 = por %p263, %p264
      %p267 = scmp.ne.s32.totalorder %s250, %s266
      %p268 = scmp.eq.s32.totalorder %s26, 0
      %p269 = por %p267, %p268
      %s271 = sadd.s32 %s270, 1
      %p274 = scmp.eq.s32.totalorder %s20, 1
      %p275 = scmp.ne.s32.totalorder %s270, %s272
      %p276 = scmp.eq.s32.totalorder %s20, 0
      %p277 = por %p275, %p276
      %p278 = scmp.ne.s32.totalorder %s270, %s272
      %p279 = scmp.eq.s32.totalorder %s25, 1
      %p280 = por %p278, %p279
      %p281 = scmp.ne.s32.totalorder %s272, %s273
      %p282 = scmp.eq.s32.totalorder %s25, 0
      %p283 = por %p281, %p282
      %p284 = scmp.ne.s32.totalorder %s272, %s273
      %p285 = scmp.eq.s32.totalorder %s26, 1
      %p286 = por %p284, %p285
      %p288 = scmp.ne.s32.totalorder %s273, %s287
      %p289 = scmp.eq.s32.totalorder %s26, 0
      %p290 = por %p288, %p289
      %s291 = ssub.s32 %s27, %s39
      %p292 = scmp.eq.s32.totalorder %s291, 0
      %s294 = sadd.s32 %s293, 1
      %s295 = scalar_select %p292, %s293, %s294
      %p298 = pneg %p292
      %p299 = scmp.eq.s32.totalorder %s20, 1
      %p300 = por %p298, %p299
      %p301 = scmp.ne.s32.totalorder %s293, %s296
      %p302 = scmp.eq.s32.totalorder %s20, 0
      %p303 = por %p301, %p302
      %p304 = scmp.ne.s32.totalorder %s293, %s296
      %p305 = scmp.eq.s32.totalorder %s25, 1
      %p306 = por %p304, %p305
      %p307 = scmp.ne.s32.totalorder %s296, %s297
      %p308 = scmp.eq.s32.totalorder %s25, 0
      %p309 = por %p307, %p308
      %p310 = scmp.ne.s32.totalorder %s296, %s297
      %p311 = scmp.eq.s32.totalorder %s26, 1
      %p312 = por %p310, %p311
      %p314 = scmp.ne.s32.totalorder %s297, %s313
      %p315 = scmp.eq.s32.totalorder %s26, 0
      %p316 = por %p314, %p315
      %p317 = scmp.le.s32.totalorder 1, %s20
      %p318 = scmp.lt.s32.totalorder %s20, 3
      %p319 = pnand %p317, %p318
      %p320 = pneg %p319
      // Predicated region
      $region9: #{tpu_custom_call.1} parent=5 // pred_check
        _
      $region10: #{tpu_custom_call.1} parent=5 // pred_check_branch
        %322 = sbr.rel (%p319) target = $region12
      $region11: #{tpu_custom_call.1} parent=5 // pred_region
        %s323 = ssub.s32 %s20, 1
        // Predicated region
        $region13: #{tpu_custom_call.1} parent=11 // pred_check
          %p324 = pneg %p79
        $region14: #{tpu_custom_call.1} parent=11 // pred_check_branch
          %326 = sbr.rel (%p324) target = $region16
        $region15: #{tpu_custom_call.1} parent=11 // pred_region
          _
        $region16: #{tpu_custom_call.1} parent=11 // pred_fallthru
          _
        // Predicated region
        $region17: #{tpu_custom_call.1} parent=11 // pred_check
          %p327 = pneg %p100
        $region18: #{tpu_custom_call.1} parent=11 // pred_check_branch
          %329 = sbr.rel (%p327) target = $region20
        $region19: #{tpu_custom_call.1} parent=11 // pred_region
          _
        $region20: #{tpu_custom_call.1} parent=11 // pred_fallthru
          _
        // Predicated region
        $region21: #{tpu_custom_call.1} parent=11 // pred_check
          %p330 = pneg %p121
        $region22: #{tpu_custom_call.1} parent=11 // pred_check_branch
          %332 = sbr.rel (%p330) target = $region24
        $region23: #{tpu_custom_call.1} parent=11 // pred_region
          _
        $region24: #{tpu_custom_call.1} parent=11 // pred_fallthru
          _
        // Predicated region
        $region25: #{tpu_custom_call.1} parent=11 // pred_check
          %p333 = pneg %p142
        $region26: #{tpu_custom_call.1} parent=11 // pred_check_branch
          %335 = sbr.rel (%p333) target = $region28
        $region27: #{tpu_custom_call.1} parent=11 // pred_region
          _
        $region28: #{tpu_custom_call.1} parent=11 // pred_fallthru
          _
        // Predicated region
        $region29: #{tpu_custom_call.1} parent=11 // pred_check
          %p336 = pneg %p163
        $region30: #{tpu_custom_call.1} parent=11 // pred_check_branch
          %338 = sbr.rel (%p336) target = $region32
        $region31: #{tpu_custom_call.1} parent=11 // pred_region
          _
        $region32: #{tpu_custom_call.1} parent=11 // pred_fallthru
          _
        // Predicated region
        $region33: #{tpu_custom_call.1} parent=11 // pred_check
          %p339 = pneg %p184
        $region34: #{tpu_custom_call.1} parent=11 // pred_check_branch
          %341 = sbr.rel (%p339) target = $region36
        $region35: #{tpu_custom_call.1} parent=11 // pred_region
          _
        $region36: #{tpu_custom_call.1} parent=11 // pred_fallthru
          _
        // Predicated region
        $region37: #{tpu_custom_call.1} parent=11 // pred_check
          %p342 = pneg %p210
        $region38: #{tpu_custom_call.1} parent=11 // pred_check_branch
          %344 = sbr.rel (%p342) target = $region40
        $region39: #{tpu_custom_call.1} parent=11 // pred_region
          %p345 = scmp.lt.s32.totalorder %s30, 0
          %s346 = scalar_select %p345, %s30, 0
          %s347 = smul.addr %s346, 8
          %s348 = smul.addr %s347, 4
          %s349 = scalar_lea.vmem %s7, %s348
        $region40: #{tpu_custom_call.1} parent=11 // pred_fallthru
          _
        // Predicated region
        $region41: #{tpu_custom_call.1} parent=11 // pred_check
          %p350 = pneg %p236
        $region42: #{tpu_custom_call.1} parent=11 // pred_check_branch
          %352 = sbr.rel (%p350) target = $region44
        $region43: #{tpu_custom_call.1} parent=11 // pred_region
          %p353 = scmp.lt.s32.totalorder %s30, 0
          %s354 = scalar_select %p353, %s30, 0
          %s355 = smul.addr %s354, 2
          %s356 = scalar_lea.vmem %s8, %s355
        $region44: #{tpu_custom_call.1} parent=11 // pred_fallthru
          _
        // Predicated region
        $region45: #{tpu_custom_call.1} parent=11 // pred_check
          %p357 = pneg %p262
        $region46: #{tpu_custom_call.1} parent=11 // pred_check_branch
          %359 = sbr.rel (%p357) target = $region48
        $region47: #{tpu_custom_call.1} parent=11 // pred_region
          %p360 = scmp.lt.s32.totalorder %s30, 0
          %s361 = scalar_select %p360, %s30, 0
          %s362 = smul.addr %s361, 16
          %s363 = smul.addr %s362, 4
          %s364 = scalar_lea.vmem %s9, %s363
        $region48: #{tpu_custom_call.1} parent=11 // pred_fallthru
          _
        // Predicated region
        $region49: #{tpu_custom_call.1} parent=11 // pred_check
          %p365 = pneg %p283
        $region50: #{tpu_custom_call.1} parent=11 // pred_check_branch
          %367 = sbr.rel (%p365) target = $region52
        $region51: #{tpu_custom_call.1} parent=11 // pred_region
          _
        $region52: #{tpu_custom_call.1} parent=11 // pred_fallthru
          _
      $region12: #{tpu_custom_call.1} parent=5 // pred_fallthru
        _
      %p368 = scmp.lt.s32.totalorder %s20, 2
      // Predicated region
      $region53: #{tpu_custom_call.1} parent=5 // pred_check
        %p369 = pneg %p368
      $region54: #{tpu_custom_call.1} parent=5 // pred_check_branch
        %371 = sbr.rel (%p369) target = $region56
      $region55: #{tpu_custom_call.1} parent=5 // pred_region
        // Predicated region
        $region57: #{tpu_custom_call.1} parent=55 // pred_check
          %p372 = pneg %p52
        $region58: #{tpu_custom_call.1} parent=55 // pred_check_branch
          %374 = sbr.rel (%p372) target = $region60
        $region59: #{tpu_custom_call.1} parent=55 // pred_region
          %p375 = scmp.lt.s32.totalorder %s27, 1
          %s376 = scalar_select %p375, %s27, 1
          %s377 = smul.addr %s376, 4
          %s378 = scalar_lea.vmem %s0, %s377
        $region60: #{tpu_custom_call.1} parent=55 // pred_fallthru
          _
      $region56: #{tpu_custom_call.1} parent=5 // pred_fallthru
        _
      %p379 = scmp.le.s32.totalorder 1, %s20
      %p380 = scmp.lt.s32.totalorder %s20, 3
      %p381 = pnand %p379, %p380
      %p382 = pneg %p381
      // Predicated region
      $region61: #{tpu_custom_call.1} parent=5 // pred_check
        _
      $region62: #{tpu_custom_call.1} parent=5 // pred_check_branch
        %384 = sbr.rel (%p381) target = $region64
      $region63: #{tpu_custom_call.1} parent=5 // pred_region
        %s385 = ssub.s32 %s20, 1
        %p386 = scmp.lt.s32.totalorder %s29, 1
        %s387 = scalar_select %p386, %s29, 1
        %s388 = smul.addr %s387, 4
        %s389 = scalar_lea.vmem %s0, %s388
        %p390 = pneg %p58
        %p391 = pneg %p55
        %p392 = pneg %p79
        %p393 = pneg %p76
        %p394 = pneg %p100
        %p395 = pneg %p97
        %p396 = pneg %p121
        %p397 = pneg %p118
        %p398 = pneg %p142
        %p399 = pneg %p139
        %p400 = pneg %p163
        %p401 = pneg %p160
        %p402 = pneg %p184
        %p403 = pneg %p181
        %p404 = scmp.lt.s32.totalorder %s30, 0
        %s405 = scalar_select %p404, %s30, 0
        %s406 = smul.addr %s405, 8
        %s407 = smul.addr %s406, 4
        %s408 = scalar_lea.vmem %s7, %s407
        %p409 = pneg %p210
        %p410 = pneg %p207
        %p411 = scmp.lt.s32.totalorder %s30, 0
        %s412 = scalar_select %p411, %s30, 0
        %s413 = smul.addr %s412, 2
        %s414 = scalar_lea.vmem %s8, %s413
        %p415 = pneg %p236
        %p416 = pneg %p233
        %p417 = scmp.lt.s32.totalorder %s30, 0
        %s418 = scalar_select %p417, %s30, 0
        %s419 = smul.addr %s418, 16
        %s420 = smul.addr %s419, 4
        %s421 = scalar_lea.vmem %s9, %s420
        %p422 = pneg %p262
        %p423 = pneg %p259
        %p424 = pneg %p283
        %p425 = pneg %p280
        %p426 = pneg %p309
        %p427 = pneg %p306
        %s428 = sand.u32 %s296, 1
        %s429 = scalar_lea.sflag [#allocation5], %s428
        %s430 = sand.u32 %s296, 1
        %s431 = smul.addr %s430, 4
        %s432 = scalar_lea.vmem [#allocation4], %s431
        %p433 = scmp.lt.s32.totalorder %s29, 1
        %s434 = scalar_select %p433, %s29, 1
        %s435 = smul.addr %s434, 4
        %s436 = scalar_lea.vmem %s0, %s435
        %p437 = scmp.lt.s32.totalorder %s30, 0
        %s438 = scalar_select %p437, %s30, 0
        %s439 = smul.addr %s438, 8
        %s440 = smul.addr %s439, 4
        %s441 = scalar_lea.vmem %s7, %s440
        %p442 = scmp.lt.s32.totalorder %s30, 0
        %s443 = scalar_select %p442, %s30, 0
        %s444 = smul.addr %s443, 2
        %s445 = scalar_lea.vmem %s8, %s444
        %p446 = scmp.lt.s32.totalorder %s30, 0
        %s447 = scalar_select %p446, %s30, 0
        %s448 = smul.addr %s447, 16
        %s449 = smul.addr %s448, 4
        %s450 = scalar_lea.vmem %s9, %s449
        %p452 = scmp.eq.s32.totalorder %s30, 0
        // Predicated region
        $region65: #{tpu_custom_call.1} parent=63 // pred_check
          %p453 = pneg %p452
        $region66: #{tpu_custom_call.1} parent=63 // pred_check_branch
          %455 = sbr.rel (%p453) target = $region68
        $region67: #{tpu_custom_call.1} parent=63 // pred_region
          %v456 = vld [vmem:[%s436] sm:$0xf]
          %v457 = vunpack.c.l.bf16 %v456
          %v458 = vld [vmem:[%s1] sm:$0x1]
          %v459 = vld [vmem:[%s2] sm:$0x1]
          %vm460 = vcmask 261120
          %v461 = vsel %vm460, %v457, 0.0
          %462 = vadd.xlane.f32.xlu0 %v461
          %v463 = vpop.xlane.xlu0 %462
          %v464 = vrcp.pop 32.0
          %v465 = vmul.f32 %v463, %v464
          %v466 = vsub.f32 %v457, %v465
          %v467 = vmul.f32 %v466, %v466
          %v468 = vsel %vm460, %v467, 0.0
          %469 = vadd.xlane.f32.xlu0 %v468
          %v470 = vpop.xlane.xlu0 %469
          %v471 = vmul.f32 %v470, %v464
          %v472 = vadd.f32 %v471, 1e-05
          %v473 = vrsqrt.pop %v472
          %v474 = vmul.f32 %v466, %v473
          %v476 = vlaneseq
          %v477 = vshrl.u32 %v476, 7
          %v478 = vsub.s32 0, %v477
          %v479 = vrot.slane %v458, %v478
          %v481 = vmul.f32 %v474, %v479
          %v483 = vlaneseq
          %v484 = vshrl.u32 %v483, 7
          %v485 = vsub.s32 0, %v484
          %v486 = vrot.slane %v459, %v485
          %v488 = vadd.f32 %v481, %v486
          %v489 = vpack.c.bf16 %v488, %v488
          %v490 = vld [vmem:[%s3] sm:$0xf]
          %v491 = vld [vmem:[%s3 + $0x4] sm:$0xf]
          %v492 = vld [vmem:[%s3 + $0x8] sm:$0xf]
          %v493 = vld [vmem:[%s3 + $0xc] sm:$0xf]
          %v498 = vunpack.c.l.b16 %v490
          %v499 = vunpack.c.l.b16 %v491
          %v500 = vunpack.c.l.b16 %v492
          %v501 = vunpack.c.l.b16 %v493
          %v502 = vpack.c.b16 %v499, %v498
          %v503 = vpack.c.b16 %v501, %v500
          %v507 = vsel %vm460, %v489, 0
          %509 = vmatprep.subr.bf16.mxu0 0
          %510 = vmatpush1.bf16.msra.mxu0 0
          %511 = vmatprep.subr.bf16.mxu0 0
          %512 = vmatpush1.bf16.msra.mxu0 0
          %513 = vmatprep.subr.bf16.mxu0 0
          %514 = vmatpush1.bf16.msra.mxu0 0
          %515 = vmatprep.subr.bf16.mxu0 0
          %516 = vmatpush1.bf16.msra.mxu0 0
          %517 = vmatprep.subr.bf16.mxu0 0
          %518 = vmatpush1.bf16.msra.mxu0 0
          %519 = vmatprep.subr.bf16.mxu0 0
          %520 = vmatpush1.bf16.msra.mxu0 0
          %521 = vmatprep.subr.bf16.mxu0 0
          %522 = vmatpush1.bf16.msra.mxu0 %v503
          %523 = vmatprep.subr.bf16.mxu0 0
          %524 = vmatpush1.bf16.msra.mxu0 %v502
          %525 = vmatprep.subr.bf16.mxu0 0
          %526 = vmatpush2.bf16.msra.mxu0 0
          %527 = vmatprep.subr.bf16.mxu0 0
          %528 = vmatpush2.bf16.msra.mxu0 0
          %529 = vmatprep.subr.bf16.mxu0 0
          %530 = vmatpush2.bf16.msra.mxu0 0
          %531 = vmatprep.subr.bf16.mxu0 0
          %532 = vmatpush2.bf16.msra.mxu0 0
          %533 = vmatprep.subr.bf16.mxu0 0
          %534 = vmatpush2.bf16.msra.mxu0 0
          %535 = vmatprep.subr.bf16.mxu0 0
          %536 = vmatpush2.bf16.msra.mxu0 0
          %537 = vmatprep.subr.bf16.mxu0 0
          %538 = vmatpush2.bf16.msra.mxu0 0
          %539 = vmatprep.subr.bf16.mxu0 0
          %540 = vmatpush2.bf16.msra.mxu0 0
          %541 = vmatprep.mubr.bf16.mxu0 0
          %542 = vmatmul.mubr.bf16.gmra.mxu0 %v507
          %v543 = vpop.f32.mrf.mxu0
          %v544 = vadd.f32 0.0, %v543
          %v545 = vpop.f32.mrf.mxu0
          %v546 = vpop.f32.mrf.mxu0
          %v547 = vpop.f32.mrf.mxu0
          %548 = vdwg.mxu0
          %550 = vrot.lane.b32.xlu0 %v544, 120
          %v551 = vpop.permute.xlu0 %550
          %553 = vrot.lane.b32.xlu0 %v544, 112
          %v554 = vpop.permute.xlu0 %553
          %556 = vrot.lane.b32.xlu0 %v544, 104
          %v557 = vpop.permute.xlu0 %556
          %v559 = vmul.f32 %v544, 0.35355338
          %v560 = vmul.f32 %v551, 0.35355338
          %v561 = vmul.f32 %v554, 0.35355338
          %v562 = vmul.f32 %v557, 0.35355338
          %v563 = vpack.c.bf16 %v559, %v559
          %v564 = vpack.c.bf16 %v560, %v560
          %v565 = vpack.c.bf16 %v561, %v561
          %v566 = vpack.c.bf16 %v562, %v562
          %v567 = vpack.c.bf16 %v544, %v544
          %v568 = vpack.c.bf16 %v551, %v551
          %v569 = vpack.c.bf16 %v554, %v554
          %v570 = vpack.c.bf16 %v557, %v557
          %v571 = vld [vmem:[%s4] sm:$0xf]
          %v572 = vld [vmem:[%s4 + $0x4] sm:$0xf]
          %v573 = vld [vmem:[%s4 + $0x8] sm:$0xf]
          %v574 = vld [vmem:[%s4 + $0xc] sm:$0xf]
          %576 = vrot.lane.b32.xlu0 %v567, 96
          %v577 = vpop.permute.xlu0 %576
          %vm578 = vcmask 64512
          %v580 = vsel %vm578, %v563, 0
          %v583 = vsel %vm578, %v577, 0
          %585 = vmatprep.subr.bf16.mxu0 0
          %586 = vmatpush1.bf16.xpose.msra.mxu0 0
          %587 = vmatprep.subr.bf16.mxu0 0
          %588 = vmatpush1.bf16.xpose.msra.mxu0 0
          %589 = vmatprep.subr.bf16.mxu0 0
          %590 = vmatpush1.bf16.xpose.msra.mxu0 0
          %591 = vmatprep.subr.bf16.mxu0 0
          %592 = vmatpush1.bf16.xpose.msra.mxu0 0
          %593 = vmatprep.subr.bf16.mxu0 0
          %594 = vmatpush1.bf16.xpose.msra.mxu0 0
          %595 = vmatprep.subr.bf16.mxu0 0
          %596 = vmatpush1.bf16.xpose.msra.mxu0 0
          %597 = vmatprep.subr.bf16.mxu0 0
          %598 = vmatpush1.bf16.xpose.msra.mxu0 0
          %599 = vmatprep.subr.bf16.mxu0 0
          %600 = vmatpush1.bf16.xpose.msra.mxu0 %v583
          %601 = vmatprep.subr.bf16.mxu0 0
          %602 = vmatpush2.bf16.xpose.msra.mxu0 0
          %603 = vmatprep.subr.bf16.mxu0 0
          %604 = vmatpush2.bf16.xpose.msra.mxu0 0
          %605 = vmatprep.subr.bf16.mxu0 0
          %606 = vmatpush2.bf16.xpose.msra.mxu0 0
          %607 = vmatprep.subr.bf16.mxu0 0
          %608 = vmatpush2.bf16.xpose.msra.mxu0 0
          %609 = vmatprep.subr.bf16.mxu0 0
          %610 = vmatpush2.bf16.xpose.msra.mxu0 0
          %611 = vmatprep.subr.bf16.mxu0 0
          %612 = vmatpush2.bf16.xpose.msra.mxu0 0
          %613 = vmatprep.subr.bf16.mxu0 0
          %614 = vmatpush2.bf16.xpose.msra.mxu0 0
          %615 = vmatprep.subr.bf16.mxu0 0
          %616 = vmatpush2.bf16.xpose.msra.mxu0 0
          %617 = vmatprep.mubr.bf16.mxu0 0
          %618 = vmatmul.mubr.bf16.gmra.mxu0 %v580
          %v619 = vpop.f32.mrf.mxu0
          %v620 = vadd.f32 0.0, %v619
          %v621 = vpop.f32.mrf.mxu0
          %v622 = vpop.f32.mrf.mxu0
          %v623 = vpop.f32.mrf.mxu0
          %624 = vdwg.mxu0
          %626 = vrot.lane.b32.xlu0 %v568, 96
          %v627 = vpop.permute.xlu0 %626
          %v629 = vsel %vm578, %v564, 0
          %v632 = vsel %vm578, %v627, 0
          %634 = vmatprep.subr.bf16.mxu0 0
          %635 = vmatpush1.bf16.xpose.msra.mxu0 0
          %636 = vmatprep.subr.bf16.mxu0 0
          %637 = vmatpush1.bf16.xpose.msra.mxu0 0
          %638 = vmatprep.subr.bf16.mxu0 0
          %639 = vmatpush1.bf16.xpose.msra.mxu0 0
          %640 = vmatprep.subr.bf16.mxu0 0
          %641 = vmatpush1.bf16.xpose.msra.mxu0 0
          %642 = vmatprep.subr.bf16.mxu0 0
          %643 = vmatpush1.bf16.xpose.msra.mxu0 0
          %644 = vmatprep.subr.bf16.mxu0 0
          %645 = vmatpush1.bf16.xpose.msra.mxu0 0
          %646 = vmatprep.subr.bf16.mxu0 0
          %647 = vmatpush1.bf16.xpose.msra.mxu0 0
          %648 = vmatprep.subr.bf16.mxu0 0
          %649 = vmatpush1.bf16.xpose.msra.mxu0 %v632
          %650 = vmatprep.subr.bf16.mxu0 0
          %651 = vmatpush2.bf16.xpose.msra.mxu0 0
          %652 = vmatprep.subr.bf16.mxu0 0
          %653 = vmatpush2.bf16.xpose.msra.mxu0 0
          %654 = vmatprep.subr.bf16.mxu0 0
          %655 = vmatpush2.bf16.xpose.msra.mxu0 0
          %656 = vmatprep.subr.bf16.mxu0 0
          %657 = vmatpush2.bf16.xpose.msra.mxu0 0
          %658 = vmatprep.subr.bf16.mxu0 0
          %659 = vmatpush2.bf16.xpose.msra.mxu0 0
          %660 = vmatprep.subr.bf16.mxu0 0
          %661 = vmatpush2.bf16.xpose.msra.mxu0 0
          %662 = vmatprep.subr.bf16.mxu0 0
          %663 = vmatpush2.bf16.xpose.msra.mxu0 0
          %664 = vmatprep.subr.bf16.mxu0 0
          %665 = vmatpush2.bf16.xpose.msra.mxu0 0
          %666 = vmatprep.mubr.bf16.mxu0 0
          %667 = vmatmul.mubr.bf16.gmra.mxu0 %v629
          %v668 = vpop.f32.mrf.mxu0
          %v669 = vadd.f32 0.0, %v668
          %v670 = vpop.f32.mrf.mxu0
          %v671 = vpop.f32.mrf.mxu0
          %v672 = vpop.f32.mrf.mxu0
          %673 = vdwg.mxu0
          %675 = vrot.lane.b32.xlu0 %v569, 96
          %v676 = vpop.permute.xlu0 %675
          %v678 = vsel %vm578, %v565, 0
          %v681 = vsel %vm578, %v676, 0
          %683 = vmatprep.subr.bf16.mxu0 0
          %684 = vmatpush1.bf16.xpose.msra.mxu0 0
          %685 = vmatprep.subr.bf16.mxu0 0
          %686 = vmatpush1.bf16.xpose.msra.mxu0 0
          %687 = vmatprep.subr.bf16.mxu0 0
          %688 = vmatpush1.bf16.xpose.msra.mxu0 0
          %689 = vmatprep.subr.bf16.mxu0 0
          %690 = vmatpush1.bf16.xpose.msra.mxu0 0
          %691 = vmatprep.subr.bf16.mxu0 0
          %692 = vmatpush1.bf16.xpose.msra.mxu0 0
          %693 = vmatprep.subr.bf16.mxu0 0
          %694 = vmatpush1.bf16.xpose.msra.mxu0 0
          %695 = vmatprep.subr.bf16.mxu0 0
          %696 = vmatpush1.bf16.xpose.msra.mxu0 0
          %697 = vmatprep.subr.bf16.mxu0 0
          %698 = vmatpush1.bf16.xpose.msra.mxu0 %v681
          %699 = vmatprep.subr.bf16.mxu0 0
          %700 = vmatpush2.bf16.xpose.msra.mxu0 0
          %701 = vmatprep.subr.bf16.mxu0 0
          %702 = vmatpush2.bf16.xpose.msra.mxu0 0
          %703 = vmatprep.subr.bf16.mxu0 0
          %704 = vmatpush2.bf16.xpose.msra.mxu0 0
          %705 = vmatprep.subr.bf16.mxu0 0
          %706 = vmatpush2.bf16.xpose.msra.mxu0 0
          %707 = vmatprep.subr.bf16.mxu0 0
          %708 = vmatpush2.bf16.xpose.msra.mxu0 0
          %709 = vmatprep.subr.bf16.mxu0 0
          %710 = vmatpush2.bf16.xpose.msra.mxu0 0
          %711 = vmatprep.subr.bf16.mxu0 0
          %712 = vmatpush2.bf16.xpose.msra.mxu0 0
          %713 = vmatprep.subr.bf16.mxu0 0
          %714 = vmatpush2.bf16.xpose.msra.mxu0 0
          %715 = vmatprep.mubr.bf16.mxu0 0
          %716 = vmatmul.mubr.bf16.gmra.mxu0 %v678
          %v717 = vpop.f32.mrf.mxu0
          %v718 = vadd.f32 0.0, %v717
          %v719 = vpop.f32.mrf.mxu0
          %v720 = vpop.f32.mrf.mxu0
          %v721 = vpop.f32.mrf.mxu0
          %722 = vdwg.mxu0
          %724 = vrot.lane.b32.xlu0 %v570, 96
          %v725 = vpop.permute.xlu0 %724
          %v727 = vsel %vm578, %v566, 0
          %v730 = vsel %vm578, %v725, 0
          %732 = vmatprep.subr.bf16.mxu0 0
          %733 = vmatpush1.bf16.xpose.msra.mxu0 0
          %734 = vmatprep.subr.bf16.mxu0 0
          %735 = vmatpush1.bf16.xpose.msra.mxu0 0
          %736 = vmatprep.subr.bf16.mxu0 0
          %737 = vmatpush1.bf16.xpose.msra.mxu0 0
          %738 = vmatprep.subr.bf16.mxu0 0
          %739 = vmatpush1.bf16.xpose.msra.mxu0 0
          %740 = vmatprep.subr.bf16.mxu0 0
          %741 = vmatpush1.bf16.xpose.msra.mxu0 0
          %742 = vmatprep.subr.bf16.mxu0 0
          %743 = vmatpush1.bf16.xpose.msra.mxu0 0
          %744 = vmatprep.subr.bf16.mxu0 0
          %745 = vmatpush1.bf16.xpose.msra.mxu0 0
          %746 = vmatprep.subr.bf16.mxu0 0
          %747 = vmatpush1.bf16.xpose.msra.mxu0 %v730
          %748 = vmatprep.subr.bf16.mxu0 0
          %749 = vmatpush2.bf16.xpose.msra.mxu0 0
          %750 = vmatprep.subr.bf16.mxu0 0
          %751 = vmatpush2.bf16.xpose.msra.mxu0 0
          %752 = vmatprep.subr.bf16.mxu0 0
          %753 = vmatpush2.bf16.xpose.msra.mxu0 0
          %754 = vmatprep.subr.bf16.mxu0 0
          %755 = vmatpush2.bf16.xpose.msra.mxu0 0
          %756 = vmatprep.subr.bf16.mxu0 0
          %757 = vmatpush2.bf16.xpose.msra.mxu0 0
          %758 = vmatprep.subr.bf16.mxu0 0
          %759 = vmatpush2.bf16.xpose.msra.mxu0 0
          %760 = vmatprep.subr.bf16.mxu0 0
          %761 = vmatpush2.bf16.xpose.msra.mxu0 0
          %762 = vmatprep.subr.bf16.mxu0 0
          %763 = vmatpush2.bf16.xpose.msra.mxu0 0
          %764 = vmatprep.mubr.bf16.mxu0 0
          %765 = vmatmul.mubr.bf16.gmra.mxu0 %v727
          %v766 = vpop.f32.mrf.mxu0
          %v767 = vadd.f32 0.0, %v766
          %v768 = vpop.f32.mrf.mxu0
          %v769 = vpop.f32.mrf.mxu0
          %v770 = vpop.f32.mrf.mxu0
          %771 = vdwg.mxu0
          %v772 = vsel %vm578, %v620, -inf
          %773 = vmax.xlane.f32.xlu0 %v772
          %v774 = vpop.xlane.xlu0 %773
          %v775 = vsel %vm578, %v669, -inf
          %776 = vmax.xlane.f32.xlu0 %v775
          %v777 = vpop.xlane.xlu0 %776
          %v778 = vsel %vm578, %v718, -inf
          %779 = vmax.xlane.f32.xlu0 %v778
          %v780 = vpop.xlane.xlu0 %779
          %v781 = vsel %vm578, %v767, -inf
          %782 = vmax.xlane.f32.xlu0 %v781
          %v783 = vpop.xlane.xlu0 %782
          %v784 = vsub.f32 -inf, %v774
          %v785 = vsub.f32 -inf, %v777
          %v786 = vsub.f32 -inf, %v780
          %v787 = vsub.f32 -inf, %v783
          %v788 = vmul.f32 %v784, 1.442695
          %v789 = vpow.pop %v788
          %v790 = vmul.f32 %v785, 1.442695
          %v791 = vpow.pop %v790
          %v792 = vmul.f32 %v786, 1.442695
          %v793 = vpow.pop %v792
          %v794 = vmul.f32 %v787, 1.442695
          %v795 = vpow.pop %v794
          %v796 = vsub.f32 %v620, %v774
          %v797 = vsub.f32 %v669, %v777
          %v798 = vsub.f32 %v718, %v780
          %v799 = vsub.f32 %v767, %v783
          %v800 = vmul.f32 %v796, 1.442695
          %v801 = vpow.pop %v800
          %v802 = vmul.f32 %v797, 1.442695
          %v803 = vpow.pop %v802
          %v804 = vmul.f32 %v798, 1.442695
          %v805 = vpow.pop %v804
          %v806 = vmul.f32 %v799, 1.442695
          %v807 = vpow.pop %v806
          %v808 = vmul.f32 %v789, 0.0
          %v809 = vmul.f32 %v791, 0.0
          %v810 = vmul.f32 %v793, 0.0
          %v811 = vmul.f32 %v795, 0.0
          %v812 = vsel %vm578, %v801, 0.0
          %813 = vadd.xlane.f32.xlu0 %v812
          %v814 = vpop.xlane.xlu0 %813
          %v815 = vsel %vm578, %v803, 0.0
          %816 = vadd.xlane.f32.xlu0 %v815
          %v817 = vpop.xlane.xlu0 %816
          %v818 = vsel %vm578, %v805, 0.0
          %819 = vadd.xlane.f32.xlu0 %v818
          %v820 = vpop.xlane.xlu0 %819
          %v821 = vsel %vm578, %v807, 0.0
          %822 = vadd.xlane.f32.xlu0 %v821
          %v823 = vpop.xlane.xlu0 %822
          %v824 = vadd.f32 %v808, %v814
          %v825 = vadd.f32 %v809, %v817
          %v826 = vadd.f32 %v810, %v820
          %v827 = vadd.f32 %v811, %v823
          %v828 = vpack.c.bf16 %v801, %v801
          %v829 = vpack.c.bf16 %v803, %v803
          %v830 = vpack.c.bf16 %v805, %v805
          %v831 = vpack.c.bf16 %v807, %v807
          %832 = vrot.lane.b32.xlu0 %v567, 64
          %v833 = vpop.permute.xlu0 %832
          %v835 = vsel %vm578, %v828, 0
          %vm837 = vcmask 1043456
          %v839 = vsel %vm837, %v833, 0
          %841 = vmatprep.subr.bf16.mxu0 0
          %842 = vmatpush1.bf16.msra.mxu0 0
          %843 = vmatprep.subr.bf16.mxu0 0
          %844 = vmatpush1.bf16.msra.mxu0 0
          %845 = vmatprep.subr.bf16.mxu0 0
          %846 = vmatpush1.bf16.msra.mxu0 0
          %847 = vmatprep.subr.bf16.mxu0 0
          %848 = vmatpush1.bf16.msra.mxu0 0
          %849 = vmatprep.subr.bf16.mxu0 0
          %850 = vmatpush1.bf16.msra.mxu0 0
          %851 = vmatprep.subr.bf16.mxu0 0
          %852 = vmatpush1.bf16.msra.mxu0 0
          %853 = vmatprep.subr.bf16.mxu0 0
          %854 = vmatpush1.bf16.msra.mxu0 0
          %855 = vmatprep.subr.bf16.mxu0 0
          %856 = vmatpush1.bf16.msra.mxu0 %v839
          %857 = vmatprep.subr.bf16.mxu0 0
          %858 = vmatpush2.bf16.msra.mxu0 0
          %859 = vmatprep.subr.bf16.mxu0 0
          %860 = vmatpush2.bf16.msra.mxu0 0
          %861 = vmatprep.subr.bf16.mxu0 0
          %862 = vmatpush2.bf16.msra.mxu0 0
          %863 = vmatprep.subr.bf16.mxu0 0
          %864 = vmatpush2.bf16.msra.mxu0 0
          %865 = vmatprep.subr.bf16.mxu0 0
          %866 = vmatpush2.bf16.msra.mxu0 0
          %867 = vmatprep.subr.bf16.mxu0 0
          %868 = vmatpush2.bf16.msra.mxu0 0
          %869 = vmatprep.subr.bf16.mxu0 0
          %870 = vmatpush2.bf16.msra.mxu0 0
          %871 = vmatprep.subr.bf16.mxu0 0
          %872 = vmatpush2.bf16.msra.mxu0 0
          %873 = vmatprep.mubr.bf16.mxu0 0
          %874 = vmatmul.mubr.bf16.gmra.mxu0 %v835
          %v875 = vpop.f32.mrf.mxu0
          %v876 = vadd.f32 0.0, %v875
          %v877 = vpop.f32.mrf.mxu0
          %v878 = vpop.f32.mrf.mxu0
          %v879 = vpop.f32.mrf.mxu0
          %880 = vdwg.mxu0
          %881 = vrot.lane.b32.xlu0 %v568, 64
          %v882 = vpop.permute.xlu0 %881
          %v884 = vsel %vm578, %v829, 0
          %v887 = vsel %vm837, %v882, 0
          %889 = vmatprep.subr.bf16.mxu0 0
          %890 = vmatpush1.bf16.msra.mxu0 0
          %891 = vmatprep.subr.bf16.mxu0 0
          %892 = vmatpush1.bf16.msra.mxu0 0
          %893 = vmatprep.subr.bf16.mxu0 0
          %894 = vmatpush1.bf16.msra.mxu0 0
          %895 = vmatprep.subr.bf16.mxu0 0
          %896 = vmatpush1.bf16.msra.mxu0 0
          %897 = vmatprep.subr.bf16.mxu0 0
          %898 = vmatpush1.bf16.msra.mxu0 0
          %899 = vmatprep.subr.bf16.mxu0 0
          %900 = vmatpush1.bf16.msra.mxu0 0
          %901 = vmatprep.subr.bf16.mxu0 0
          %902 = vmatpush1.bf16.msra.mxu0 0
          %903 = vmatprep.subr.bf16.mxu0 0
          %904 = vmatpush1.bf16.msra.mxu0 %v887
          %905 = vmatprep.subr.bf16.mxu0 0
          %906 = vmatpush2.bf16.msra.mxu0 0
          %907 = vmatprep.subr.bf16.mxu0 0
          %908 = vmatpush2.bf16.msra.mxu0 0
          %909 = vmatprep.subr.bf16.mxu0 0
          %910 = vmatpush2.bf16.msra.mxu0 0
          %911 = vmatprep.subr.bf16.mxu0 0
          %912 = vmatpush2.bf16.msra.mxu0 0
          %913 = vmatprep.subr.bf16.mxu0 0
          %914 = vmatpush2.bf16.msra.mxu0 0
          %915 = vmatprep.subr.bf16.mxu0 0
          %916 = vmatpush2.bf16.msra.mxu0 0
          %917 = vmatprep.subr.bf16.mxu0 0
          %918 = vmatpush2.bf16.msra.mxu0 0
          %919 = vmatprep.subr.bf16.mxu0 0
          %920 = vmatpush2.bf16.msra.mxu0 0
          %921 = vmatprep.mubr.bf16.mxu0 0
          %922 = vmatmul.mubr.bf16.gmra.mxu0 %v884
          %v923 = vpop.f32.mrf.mxu0
          %v924 = vadd.f32 0.0, %v923
          %v925 = vpop.f32.mrf.mxu0
          %v926 = vpop.f32.mrf.mxu0
          %v927 = vpop.f32.mrf.mxu0
          %928 = vdwg.mxu0
          %929 = vrot.lane.b32.xlu0 %v569, 64
          %v930 = vpop.permute.xlu0 %929
          %v932 = vsel %vm578, %v830, 0
          %v935 = vsel %vm837, %v930, 0
          %937 = vmatprep.subr.bf16.mxu0 0
          %938 = vmatpush1.bf16.msra.mxu0 0
          %939 = vmatprep.subr.bf16.mxu0 0
          %940 = vmatpush1.bf16.msra.mxu0 0
          %941 = vmatprep.subr.bf16.mxu0 0
          %942 = vmatpush1.bf16.msra.mxu0 0
          %943 = vmatprep.subr.bf16.mxu0 0
          %944 = vmatpush1.bf16.msra.mxu0 0
          %945 = vmatprep.subr.bf16.mxu0 0
          %946 = vmatpush1.bf16.msra.mxu0 0
          %947 = vmatprep.subr.bf16.mxu0 0
          %948 = vmatpush1.bf16.msra.mxu0 0
          %949 = vmatprep.subr.bf16.mxu0 0
          %950 = vmatpush1.bf16.msra.mxu0 0
          %951 = vmatprep.subr.bf16.mxu0 0
          %952 = vmatpush1.bf16.msra.mxu0 %v935
          %953 = vmatprep.subr.bf16.mxu0 0
          %954 = vmatpush2.bf16.msra.mxu0 0
          %955 = vmatprep.subr.bf16.mxu0 0
          %956 = vmatpush2.bf16.msra.mxu0 0
          %957 = vmatprep.subr.bf16.mxu0 0
          %958 = vmatpush2.bf16.msra.mxu0 0
          %959 = vmatprep.subr.bf16.mxu0 0
          %960 = vmatpush2.bf16.msra.mxu0 0
          %961 = vmatprep.subr.bf16.mxu0 0
          %962 = vmatpush2.bf16.msra.mxu0 0
          %963 = vmatprep.subr.bf16.mxu0 0
          %964 = vmatpush2.bf16.msra.mxu0 0
          %965 = vmatprep.subr.bf16.mxu0 0
          %966 = vmatpush2.bf16.msra.mxu0 0
          %967 = vmatprep.subr.bf16.mxu0 0
          %968 = vmatpush2.bf16.msra.mxu0 0
          %969 = vmatprep.mubr.bf16.mxu0 0
          %970 = vmatmul.mubr.bf16.gmra.mxu0 %v932
          %v971 = vpop.f32.mrf.mxu0
          %v972 = vadd.f32 0.0, %v971
          %v973 = vpop.f32.mrf.mxu0
          %v974 = vpop.f32.mrf.mxu0
          %v975 = vpop.f32.mrf.mxu0
          %976 = vdwg.mxu0
          %977 = vrot.lane.b32.xlu0 %v570, 64
          %v978 = vpop.permute.xlu0 %977
          %v980 = vsel %vm578, %v831, 0
          %v983 = vsel %vm837, %v978, 0
          %985 = vmatprep.subr.bf16.mxu0 0
          %986 = vmatpush1.bf16.msra.mxu0 0
          %987 = vmatprep.subr.bf16.mxu0 0
          %988 = vmatpush1.bf16.msra.mxu0 0
          %989 = vmatprep.subr.bf16.mxu0 0
          %990 = vmatpush1.bf16.msra.mxu0 0
          %991 = vmatprep.subr.bf16.mxu0 0
          %992 = vmatpush1.bf16.msra.mxu0 0
          %993 = vmatprep.subr.bf16.mxu0 0
          %994 = vmatpush1.bf16.msra.mxu0 0
          %995 = vmatprep.subr.bf16.mxu0 0
          %996 = vmatpush1.bf16.msra.mxu0 0
          %997 = vmatprep.subr.bf16.mxu0 0
          %998 = vmatpush1.bf16.msra.mxu0 0
          %999 = vmatprep.subr.bf16.mxu0 0
          %1000 = vmatpush1.bf16.msra.mxu0 %v983
          %1001 = vmatprep.subr.bf16.mxu0 0
          %1002 = vmatpush2.bf16.msra.mxu0 0
          %1003 = vmatprep.subr.bf16.mxu0 0
          %1004 = vmatpush2.bf16.msra.mxu0 0
          %1005 = vmatprep.subr.bf16.mxu0 0
          %1006 = vmatpush2.bf16.msra.mxu0 0
          %1007 = vmatprep.subr.bf16.mxu0 0
          %1008 = vmatpush2.bf16.msra.mxu0 0
          %1009 = vmatprep.subr.bf16.mxu0 0
          %1010 = vmatpush2.bf16.msra.mxu0 0
          %1011 = vmatprep.subr.bf16.mxu0 0
          %1012 = vmatpush2.bf16.msra.mxu0 0
          %1013 = vmatprep.subr.bf16.mxu0 0
          %1014 = vmatpush2.bf16.msra.mxu0 0
          %1015 = vmatprep.subr.bf16.mxu0 0
          %1016 = vmatpush2.bf16.msra.mxu0 0
          %1017 = vmatprep.mubr.bf16.mxu0 0
          %1018 = vmatmul.mubr.bf16.gmra.mxu0 %v980
          %v1019 = vpop.f32.mrf.mxu0
          %v1020 = vadd.f32 0.0, %v1019
          %v1021 = vpop.f32.mrf.mxu0
          %v1022 = vpop.f32.mrf.mxu0
          %v1023 = vpop.f32.mrf.mxu0
          %1024 = vdwg.mxu0
          %v1025 = vadd.f32 %v808, %v876
          %v1026 = vadd.f32 %v809, %v924
          %v1027 = vadd.f32 %v810, %v972
          %v1028 = vadd.f32 %v811, %v1020
          %v1029 = vrcp.pop %v824
          %v1030 = vrcp.pop %v825
          %v1031 = vrcp.pop %v826
          %v1032 = vrcp.pop %v827
          %v1033 = vmul.f32 %v824, %v1029
          %v1034 = vmul.f32 %v825, %v1030
          %v1035 = vmul.f32 %v826, %v1031
          %v1036 = vmul.f32 %v827, %v1032
          %v1037 = vsub.f32 2.0, %v1033
          %v1038 = vsub.f32 2.0, %v1034
          %v1039 = vsub.f32 2.0, %v1035
          %v1040 = vsub.f32 2.0, %v1036
          %v1041 = vmul.f32 %v1029, %v1037
          %v1042 = vmul.f32 %v1030, %v1038
          %v1043 = vmul.f32 %v1031, %v1039
          %v1044 = vmul.f32 %v1032, %v1040
          %v1045 = vmul.f32 %v1025, %v1041
          %v1046 = vmul.f32 %v1026, %v1042
          %v1047 = vmul.f32 %v1027, %v1043
          %v1048 = vmul.f32 %v1028, %v1044
          %1050 = vrot.lane.b32.xlu0 %v1046, 8
          %v1051 = vpop.permute.xlu0 %1050
          %1054 = vrot.lane.b32.xlu0 %v1047, 16
          %v1055 = vpop.permute.xlu0 %1054
          %1058 = vrot.lane.b32.xlu0 %v1048, 24
          %v1059 = vpop.permute.xlu0 %1058
          %v1061 = vsel %vm578, %v1045, %v1051
          %vm1062 = vcmask 130048
          %v1063 = vsel %vm1062, %v1061, %v1055
          %vm1064 = vcmask 195584
          %v1065 = vsel %vm1064, %v1063, %v1059
          %v1066 = vpack.c.bf16 %v1065, %v1065
          %v1071 = vunpack.c.l.b16 %v571
          %v1072 = vunpack.c.l.b16 %v572
          %v1073 = vunpack.c.l.b16 %v573
          %v1074 = vunpack.c.l.b16 %v574
          %v1075 = vpack.c.b16 %v1072, %v1071
          %v1076 = vpack.c.b16 %v1074, %v1073
          %v1080 = vsel %vm460, %v1066, 0
          %1082 = vmatprep.subr.bf16.mxu0 0
          %1083 = vmatpush1.bf16.msra.mxu0 0
          %1084 = vmatprep.subr.bf16.mxu0 0
          %1085 = vmatpush1.bf16.msra.mxu0 0
          %1086 = vmatprep.subr.bf16.mxu0 0
          %1087 = vmatpush1.bf16.msra.mxu0 0
          %1088 = vmatprep.subr.bf16.mxu0 0
          %1089 = vmatpush1.bf16.msra.mxu0 0
          %1090 = vmatprep.subr.bf16.mxu0 0
          %1091 = vmatpush1.bf16.msra.mxu0 0
          %1092 = vmatprep.subr.bf16.mxu0 0
          %1093 = vmatpush1.bf16.msra.mxu0 0
          %1094 = vmatprep.subr.bf16.mxu0 0
          %1095 = vmatpush1.bf16.msra.mxu0 %v1076
          %1096 = vmatprep.subr.bf16.mxu0 0
          %1097 = vmatpush1.bf16.msra.mxu0 %v1075
          %1098 = vmatprep.subr.bf16.mxu0 0
          %1099 = vmatpush2.bf16.msra.mxu0 0
          %1100 = vmatprep.subr.bf16.mxu0 0
          %1101 = vmatpush2.bf16.msra.mxu0 0
          %1102 = vmatprep.subr.bf16.mxu0 0
          %1103 = vmatpush2.bf16.msra.mxu0 0
          %1104 = vmatprep.subr.bf16.mxu0 0
          %1105 = vmatpush2.bf16.msra.mxu0 0
          %1106 = vmatprep.subr.bf16.mxu0 0
          %1107 = vmatpush2.bf16.msra.mxu0 0
          %1108 = vmatprep.subr.bf16.mxu0 0
          %1109 = vmatpush2.bf16.msra.mxu0 0
          %1110 = vmatprep.subr.bf16.mxu0 0
          %1111 = vmatpush2.bf16.msra.mxu0 0
          %1112 = vmatprep.subr.bf16.mxu0 0
          %1113 = vmatpush2.bf16.msra.mxu0 0
          %1114 = vmatprep.mubr.bf16.mxu0 0
          %1115 = vmatmul.mubr.bf16.gmra.mxu0 %v1080
          %v1116 = vpop.f32.mrf.mxu0
          %v1117 = vadd.f32 %v457, %v1116
          %v1118 = vpop.f32.mrf.mxu0
          %v1119 = vpop.f32.mrf.mxu0
          %v1120 = vpop.f32.mrf.mxu0
          %1121 = vdwg.mxu0
          %v1122 = vld [vmem:[%s5] sm:$0x1]
          %v1123 = vld [vmem:[%s6] sm:$0x1]
          %v1124 = vsel %vm460, %v1117, 0.0
          %1125 = vadd.xlane.f32.xlu0 %v1124
          %v1126 = vpop.xlane.xlu0 %1125
          %v1127 = vmul.f32 %v1126, %v464
          %v1128 = vsub.f32 %v1117, %v1127
          %v1129 = vmul.f32 %v1128, %v1128
          %v1130 = vsel %vm460, %v1129, 0.0
          %1131 = vadd.xlane.f32.xlu0 %v1130
          %v1132 = vpop.xlane.xlu0 %1131
          %v1133 = vmul.f32 %v1132, %v464
          %v1134 = vadd.f32 %v1133, 1e-05
          %v1135 = vrsqrt.pop %v1134
          %v1136 = vmul.f32 %v1128, %v1135
          %v1138 = vlaneseq
          %v1139 = vshrl.u32 %v1138, 7
          %v1140 = vsub.s32 0, %v1139
          %v1141 = vrot.slane %v1122, %v1140
          %v1143 = vmul.f32 %v1136, %v1141
          %v1145 = vlaneseq
          %v1146 = vshrl.u32 %v1145, 7
          %v1147 = vsub.s32 0, %v1146
          %v1148 = vrot.slane %v1123, %v1147
          %v1150 = vadd.f32 %v1143, %v1148
          %v1151 = vpack.c.bf16 %v1150, %v1150
          %vm1152 = vcmask 257024
          %1153 = vst.msk [vmem:[#allocation2] sm:$0xf] %vm1152, %v1151
          %v1154 = vld [vmem:[%s10] sm:$0x1]
          %v1156 = vlaneseq
          %v1157 = vshrl.u32 %v1156, 7
          %v1158 = vsub.s32 0, %v1157
          %v1159 = vrot.slane %v1154, %v1158
          %v1161 = vadd.f32 %v1117, %v1159
          %1162 = vst.msk [vmem:[#allocation3] sm:$0xff] %vm460, %v1161
        $region68: #{tpu_custom_call.1} parent=63 // pred_fallthru
          _
        %v1163 = vld [vmem:[#allocation2] sm:$0xf]
        %v1164 = vld [vmem:[%s441] sm:$0xff]
        %v1165 = vld [vmem:[%s441 + $0x8] sm:$0xff]
        %v1166 = vld [vmem:[%s441 + $0x10] sm:$0xff]
        %v1167 = vld [vmem:[%s441 + $0x18] sm:$0xff]
        %v1168 = vld [vmem:[%s445] sm:$0x3]
        %v1170 = vlaneseq
        %v1171 = vshrl.u32 %v1170, 7
        %v1172 = vsub.s32 0, %v1171
        %v1173 = vrot.slane %v1168, %v1172
        %v1174 = vlaneseq
        %v1175 = vshrl.u32 %v1174, 7
        %v1176 = vsub.s32 1, %v1175
        %v1177 = vrot.slane %v1168, %v1176
        %v1184 = vunpack.c.l.b16 %v1164
        %v1185 = vunpack.c.h.b16 %v1164
        %v1186 = vunpack.c.l.b16 %v1165
        %v1187 = vunpack.c.h.b16 %v1165
        %v1188 = vunpack.c.l.b16 %v1166
        %v1189 = vunpack.c.h.b16 %v1166
        %v1190 = vunpack.c.l.b16 %v1167
        %v1191 = vunpack.c.h.b16 %v1167
        %v1192 = vpack.c.b16 %v1186, %v1184
        %v1193 = vpack.c.b16 %v1187, %v1185
        %v1194 = vpack.c.b16 %v1190, %v1188
        %v1195 = vpack.c.b16 %v1191, %v1189
        %vm1200 = vcmask 261120
        %v1202 = vsel %vm1200, %v1163, 0
        %1204 = vmatprep.subr.bf16.mxu0 0
        %1205 = vmatpush1.bf16.msra.mxu0 0
        %1206 = vmatprep.subr.bf16.mxu0 0
        %1207 = vmatpush1.bf16.msra.mxu0 0
        %1208 = vmatprep.subr.bf16.mxu0 0
        %1209 = vmatpush1.bf16.msra.mxu0 0
        %1210 = vmatprep.subr.bf16.mxu0 0
        %1211 = vmatpush1.bf16.msra.mxu0 0
        %1212 = vmatprep.subr.bf16.mxu0 0
        %1213 = vmatpush1.bf16.msra.mxu0 0
        %1214 = vmatprep.subr.bf16.mxu0 0
        %1215 = vmatpush1.bf16.msra.mxu0 0
        %1216 = vmatprep.subr.bf16.mxu0 %v1195
        %1217 = vmatpush1.bf16.msra.mxu0 %v1194
        %1218 = vmatprep.subr.bf16.mxu0 %v1193
        %1219 = vmatpush1.bf16.msra.mxu0 %v1192
        %1220 = vmatprep.subr.bf16.mxu0 0
        %1221 = vmatpush2.bf16.msra.mxu0 0
        %1222 = vmatprep.subr.bf16.mxu0 0
        %1223 = vmatpush2.bf16.msra.mxu0 0
        %1224 = vmatprep.subr.bf16.mxu0 0
        %1225 = vmatpush2.bf16.msra.mxu0 0
        %1226 = vmatprep.subr.bf16.mxu0 0
        %1227 = vmatpush2.bf16.msra.mxu0 0
        %1228 = vmatprep.subr.bf16.mxu0 0
        %1229 = vmatpush2.bf16.msra.mxu0 0
        %1230 = vmatprep.subr.bf16.mxu0 0
        %1231 = vmatpush2.bf16.msra.mxu0 0
        %1232 = vmatprep.subr.bf16.mxu0 0
        %1233 = vmatpush2.bf16.msra.mxu0 0
        %1234 = vmatprep.subr.bf16.mxu0 0
        %1235 = vmatpush2.bf16.msra.mxu0 0
        %1236 = vmatprep.mubr.bf16.mxu0 0
        %1237 = vmatmul.mubr.bf16.gmra.mxu0 %v1202
        %v1238 = vpop.f32.mrf.mxu0
        %v1239 = vadd.f32 %v1173, %v1238
        %v1240 = vpop.f32.mrf.mxu0
        %v1241 = vadd.f32 %v1177, %v1240
        %v1242 = vpop.f32.mrf.mxu0
        %v1243 = vpop.f32.mrf.mxu0
        %1244 = vdwg.mxu0
        %v1245 = vmul.f32 %v1241, %v1241
        %v1246 = vmul.f32 %v1241, %v1245
        %v1247 = vmul.f32 %v1246, 0.044715
        %v1248 = vadd.f32 %v1241, %v1247
        %v1249 = vmul.f32 %v1248, 0.7978846
        %v1250 = vtanh.pop %v1249
        %v1251 = vadd.f32 %v1250, 1.0
        %v1252 = vmul.f32 %v1251, 0.5
        %v1253 = vmul.f32 %v1241, %v1252
        %v1254 = vmul.f32 %v1239, %v1253
        %v1255 = vld [vmem:[#allocation3] sm:$0xff]
        %v1256 = vpack.c.bf16 %v1254, %v1254
        %v1257 = vld [vmem:[%s450] sm:$0xf]
        %v1258 = vld [vmem:[%s450 + $0x4] sm:$0xf]
        %v1259 = vld [vmem:[%s450 + $0x8] sm:$0xf]
        %v1260 = vld [vmem:[%s450 + $0xc] sm:$0xf]
        %v1261 = vld [vmem:[%s450 + $0x10] sm:$0xf]
        %v1262 = vld [vmem:[%s450 + $0x14] sm:$0xf]
        %v1263 = vld [vmem:[%s450 + $0x18] sm:$0xf]
        %v1264 = vld [vmem:[%s450 + $0x1c] sm:$0xf]
        %v1265 = vld [vmem:[%s450 + $0x20] sm:$0xf]
        %v1266 = vld [vmem:[%s450 + $0x24] sm:$0xf]
        %v1267 = vld [vmem:[%s450 + $0x28] sm:$0xf]
        %v1268 = vld [vmem:[%s450 + $0x2c] sm:$0xf]
        %v1269 = vld [vmem:[%s450 + $0x30] sm:$0xf]
        %v1270 = vld [vmem:[%s450 + $0x34] sm:$0xf]
        %v1271 = vld [vmem:[%s450 + $0x38] sm:$0xf]
        %v1272 = vld [vmem:[%s450 + $0x3c] sm:$0xf]
        %v1289 = vunpack.c.l.b16 %v1257
        %v1290 = vunpack.c.l.b16 %v1258
        %v1291 = vunpack.c.l.b16 %v1259
        %v1292 = vunpack.c.l.b16 %v1260
        %v1293 = vunpack.c.l.b16 %v1261
        %v1294 = vunpack.c.l.b16 %v1262
        %v1295 = vunpack.c.l.b16 %v1263
        %v1296 = vunpack.c.l.b16 %v1264
        %v1297 = vunpack.c.l.b16 %v1265
        %v1298 = vunpack.c.l.b16 %v1266
        %v1299 = vunpack.c.l.b16 %v1267
        %v1300 = vunpack.c.l.b16 %v1268
        %v1301 = vunpack.c.l.b16 %v1269
        %v1302 = vunpack.c.l.b16 %v1270
        %v1303 = vunpack.c.l.b16 %v1271
        %v1304 = vunpack.c.l.b16 %v1272
        %v1305 = vpack.c.b16 %v1290, %v1289
        %v1306 = vpack.c.b16 %v1292, %v1291
        %v1307 = vpack.c.b16 %v1294, %v1293
        %v1308 = vpack.c.b16 %v1296, %v1295
        %v1309 = vpack.c.b16 %v1298, %v1297
        %v1310 = vpack.c.b16 %v1300, %v1299
        %v1311 = vpack.c.b16 %v1302, %v1301
        %v1312 = vpack.c.b16 %v1304, %v1303
        %1321 = vmatprep.subr.bf16.mxu0 0
        %1322 = vmatpush1.bf16.msra.mxu0 %v1312
        %1323 = vmatprep.subr.bf16.mxu0 0
        %1324 = vmatpush1.bf16.msra.mxu0 %v1311
        %1325 = vmatprep.subr.bf16.mxu0 0
        %1326 = vmatpush1.bf16.msra.mxu0 %v1310
        %1327 = vmatprep.subr.bf16.mxu0 0
        %1328 = vmatpush1.bf16.msra.mxu0 %v1309
        %1329 = vmatprep.subr.bf16.mxu0 0
        %1330 = vmatpush1.bf16.msra.mxu0 %v1308
        %1331 = vmatprep.subr.bf16.mxu0 0
        %1332 = vmatpush1.bf16.msra.mxu0 %v1307
        %1333 = vmatprep.subr.bf16.mxu0 0
        %1334 = vmatpush1.bf16.msra.mxu0 %v1306
        %1335 = vmatprep.subr.bf16.mxu0 0
        %1336 = vmatpush1.bf16.msra.mxu0 %v1305
        %1337 = vmatprep.subr.bf16.mxu0 0
        %1338 = vmatpush2.bf16.msra.mxu0 0
        %1339 = vmatprep.subr.bf16.mxu0 0
        %1340 = vmatpush2.bf16.msra.mxu0 0
        %1341 = vmatprep.subr.bf16.mxu0 0
        %1342 = vmatpush2.bf16.msra.mxu0 0
        %1343 = vmatprep.subr.bf16.mxu0 0
        %1344 = vmatpush2.bf16.msra.mxu0 0
        %1345 = vmatprep.subr.bf16.mxu0 0
        %1346 = vmatpush2.bf16.msra.mxu0 0
        %1347 = vmatprep.subr.bf16.mxu0 0
        %1348 = vmatpush2.bf16.msra.mxu0 0
        %1349 = vmatprep.subr.bf16.mxu0 0
        %1350 = vmatpush2.bf16.msra.mxu0 0
        %1351 = vmatprep.subr.bf16.mxu0 0
        %1352 = vmatpush2.bf16.msra.mxu0 0
        %1353 = vmatprep.mubr.bf16.mxu0 0
        %1354 = vmatmul.mubr.bf16.gmra.mxu0 %v1256
        %v1355 = vpop.f32.mrf.mxu0
        %v1356 = vadd.f32 0.0, %v1355
        %v1357 = vpop.f32.mrf.mxu0
        %v1358 = vpop.f32.mrf.mxu0
        %v1359 = vpop.f32.mrf.mxu0
        %1360 = vdwg.mxu0
        %v1361 = vadd.f32 %v1255, %v1356
        %1362 = vst.msk [vmem:[#allocation3] sm:$0xff] %vm1200, %v1361
        // Predicated region
        $region69: #{tpu_custom_call.1} parent=63 // pred_check
          %p1363 = pneg %p452
        $region70: #{tpu_custom_call.1} parent=63 // pred_check_branch
          %1365 = sbr.rel (%p1363) target = $region72
        $region71: #{tpu_custom_call.1} parent=63 // pred_region
          %v1366 = vld [vmem:[#allocation3] sm:$0xff]
          %v1367 = vpack.c.bf16 %v1366, %v1366
          %vm1368 = vcmask 257024
          %1369 = vst.msk [vmem:[%s432] sm:$0xf] %vm1368, %v1367
        $region72: #{tpu_custom_call.1} parent=63 // pred_fallthru
          _
        %s1370 = sand.u32 %s296, 1
        %s1371 = scalar_lea.sflag [#allocation5], %s1370
        %s1372 = sand.u32 %s296, 1
        %s1373 = smul.addr %s1372, 4
        %s1374 = scalar_lea.vmem [#allocation4], %s1373
        // Predicated region
        $region73: #{tpu_custom_call.1} parent=63 // pred_check
          %p1375 = pneg %p306
        $region74: #{tpu_custom_call.1} parent=63 // pred_check_branch
          %1377 = sbr.rel (%p1375) target = $region76
        $region75: #{tpu_custom_call.1} parent=63 // pred_region
          %s1379 = ssub.s32 64, 64
          %1380 = vsyncadd %s1371, %s1379
          %s1381 = smul.addr %s29, 64
          %s1382 = scalar_lea.hbm %s11, %s1381
          %s1384 = sshll.u32 %s1374, 4
          %s1385 = int_to_ptr.vmem [resolvable:$true] %s1384
          %1387 = dma.vmem_to_hbm [thread:$0]  %s1385, 64, %s1382, %s1371
        $region76: #{tpu_custom_call.1} parent=63 // pred_fallthru
          _
      $region64: #{tpu_custom_call.1} parent=5 // pred_fallthru
        _
      %p1388 = scmp.le.s32.totalorder 2, %s20
      // Predicated region
      $region77: #{tpu_custom_call.1} parent=5 // pred_check
        %p1389 = pneg %p1388
      $region78: #{tpu_custom_call.1} parent=5 // pred_check_branch
        %1391 = sbr.rel (%p1389) target = $region80
      $region79: #{tpu_custom_call.1} parent=5 // pred_region
        %s1392 = ssub.s32 %s20, 2
        // Predicated region
        $region81: #{tpu_custom_call.1} parent=79 // pred_check
          %p1393 = pneg %p312
        $region82: #{tpu_custom_call.1} parent=79 // pred_check_branch
          %1395 = sbr.rel (%p1393) target = $region84
        $region83: #{tpu_custom_call.1} parent=79 // pred_region
          %s1396 = sand.u32 %s297, 1
          %s1397 = scalar_lea.sflag [#allocation5], %s1396
          %s1398 = sand.u32 %s297, 1
          %s1399 = smul.addr %s1398, 4
          %s1400 = scalar_lea.vmem [#allocation4], %s1399
          %1401 = dma.done %s1397, 64
        $region84: #{tpu_custom_call.1} parent=79 // pred_fallthru
          _
      $region80: #{tpu_custom_call.1} parent=5 // pred_fallthru
        _
    $region6: #{tpu_custom_call.1} parent=1 // loop_footer
      %s24 = sadd.s32 1, %s20
    $region7: #{tpu_custom_call.1} parent=1 // loop_footer_branch
      %19 = sbr.rel target = $region3
    $region8: #{tpu_custom_call.1} parent=1 // loop_exit
      _
    %1402 = vsyncpa [#allocation5], 1
    %s1403 = scalar_lea.sflag [#allocation5], 1
    %1404 = vsyncpa %s1403, 1

</llo_original>
